<compile_context>
chip_gen: v7x
topology: tpu7x:2x2x1
jax: 0.10.0
libtpu: 0.0.40
codegen_flags: <defaults>
</compile_context>

<pallas_src>
import functools
import math

import jax
import jax.numpy as jnp
from jax import lax
from jax.experimental import pallas as pl
from jax.experimental.pallas import tpu as pltpu

_NEG_INF = -1e30          # additive mask value, kept in f32
_LOG2E = 1.4426950408889634


def _pick_tile(total, preferred, align):
    """Largest multiple of `align` dividing `total`, capped at `preferred`;
    falls back to `total` (block == full extent is always legal)."""
    best = None
    c = align
    while c <= min(total, preferred):
        if total % c == 0:
            best = c
        c += align
    return best if best is not None else total


def _flash_attend_kernel(*refs, H, D, TQ, TK, split, causal, scale,
                         mxu_dtype, exp_dtype, precision):
    HD = H * D
    if split:
        if causal:
            q_ref, k_ref, v_ref, o_ref, qs_ref, m_ref, l_ref, acc_ref = refs
            mask_ref = None
        else:
            (q_ref, k_ref, v_ref, mask_ref, o_ref,
             qs_ref, m_ref, l_ref, acc_ref) = refs

        def load_k(h):
            return k_ref[0, :, h * D:(h + 1) * D]

        def load_v(h):
            return v_ref[0, :, h * D:(h + 1) * D]

        def q_slab():
            return q_ref[0, :, :]
    else:
        if causal:
            q_ref, kv_ref, o_ref, qs_ref, m_ref, l_ref, acc_ref = refs
            mask_ref = None
        else:
            q_ref, kv_ref, mask_ref, o_ref, qs_ref, m_ref, l_ref, acc_ref = refs

        def load_k(h):
            return kv_ref[0, :, (H + h) * D:(H + h + 1) * D]

        def load_v(h):
            return kv_ref[0, :, (2 * H + h) * D:(2 * H + h + 1) * D]

        def q_slab():
            return q_ref[0, :, :HD]

    qi = pl.program_id(1)
    ki = pl.program_id(2)
    nk = pl.num_programs(2)

    @pl.when(ki == 0)
    def _init():
        m_ref[...] = jnp.full(m_ref.shape, -jnp.inf, dtype=m_ref.dtype)
        l_ref[...] = jnp.zeros(l_ref.shape, dtype=l_ref.dtype)
        acc_ref[...] = jnp.zeros(acc_ref.shape, dtype=acc_ref.dtype)
        # Hoisted, pre-scaled (log2e folded) Q in MXU dtype; constant along ki.
        qs_ref[...] = (q_slab().astype(jnp.float32)
                       * (scale * _LOG2E)).astype(mxu_dtype)

    def _update():
        if causal:
            rows = qi * TQ + lax.broadcasted_iota(jnp.int32, (TQ, TK), 0)
            cols = ki * TK + lax.broadcasted_iota(jnp.int32, (TQ, TK), 1)
            keep = rows >= cols
        else:
            keep = mask_ref[...] != 0                          # (TQ, TK) bool

        for h in range(H):
            q = qs_ref[:, h * D:(h + 1) * D]                   # scaled, mxu dtype
            k = load_k(h).astype(mxu_dtype)
            v = load_v(h).astype(mxu_dtype)

            # QK^T: contract last dims directly, accumulate in f32.
            s = lax.dot_general(q, k, (((1,), (1,)), ((), ())),
                                preferred_element_type=jnp.float32,
                                precision=precision)           # (TQ, TK) f32
            s = jnp.where(keep, s, _NEG_INF)

            # Online softmax: max/alpha/l/acc in f32, exp in exp_dtype (EUP).
            m_prev = m_ref[h]                                  # (TQ, 1)
            m_new = jnp.maximum(m_prev, jnp.max(s, axis=-1, keepdims=True))
            alpha = jnp.exp2(m_prev - m_new)                   # f32
            p = jnp.exp2((s - m_new).astype(exp_dtype))        # (TQ, TK)
            l_ref[h] = alpha * l_ref[h] + jnp.sum(
                p.astype(jnp.float32), axis=-1, keepdims=True)

            pv = lax.dot_general(p.astype(mxu_dtype), v,
                                 (((1,), (0,)), ((), ())),
                                 preferred_element_type=jnp.float32,
                                 precision=precision)          # (TQ, D) f32
            acc_ref[h] = alpha * acc_ref[h] + pv
            m_ref[h] = m_new

    if causal:
        # Skip compute on KV tiles fully above the diagonal (their DMA is also
        # skipped via the clamped KV index_map in the wrapper).
        @pl.when(qi * TQ + (TQ - 1) >= ki * TK)
        def _maybe_update():
            _update()
    else:
        _update()

    @pl.when(ki == nk - 1)
    def _finalize():
        outs = []
        for h in range(H):
            # Exact divide: runs once per (b, qi) tile; keeps the f32 path at
            # ~1e-6 error (the old approx reciprocal was the accuracy floor).
            outs.append(acc_ref[h] / l_ref[h])
        # Single lane-dense store of the (TQ, H*D) slab.
        o_ref[0] = jnp.concatenate(outs, axis=-1).astype(o_ref.dtype)


def attend_forward(qkv, attn_mask, *, num_heads, head_dim, d_out,
                   tq=512, tk=256, mxu_dtype=jnp.bfloat16):
    """Matches Attend.forward (eval mode, dropout=0).

    qkv:       (B, T, 3 * num_heads * head_dim), packed as [q | k | v] per head.
    attn_mask: (T, T) bool (True = attend) or None (=> is_causal=True).
    returns:   (B, T, d_out)
    """
    B, T, E = qkv.shape
    H, D = num_heads, head_dim
    HD = H * D
    assert E == 3 * HD, "packed qkv last dim must be 3*num_heads*head_dim"
    assert d_out == HD, "d_out must equal num_heads*head_dim"

    TQ = _pick_tile(T, tq, 128)   # 128-aligned query tile (fallback: full T)
    TK = _pick_tile(T, tk, 128)   # 128-aligned kv tile (fallback: full T)
    scale = 1.0 / math.sqrt(D)
    causal = attn_mask is None
    # Last-dim-blocked Q/K/V specs need a 128-multiple lane block.
    split = (HD % 128) == 0
    exp_dtype = jnp.bfloat16 if mxu_dtype == jnp.bfloat16 else jnp.float32
    precision = lax.Precision.HIGHEST if mxu_dtype == jnp.float32 else None

    # Keep double-buffered tiles + scratch under ~40 MiB (v7x has 64 MiB VMEM).
    itm = jnp.dtype(qkv.dtype).itemsize
    mitm = jnp.dtype(mxu_dtype).itemsize

    def _tile_bytes(tq_, tk_):
        q_b = tq_ * (HD if split else E) * itm
        kv_b = tk_ * (2 * HD if split else E) * itm
        out_b = tq_ * HD * itm
        mask_b = 0 if causal else tq_ * tk_
        scratch = H * tq_ * (D + 2) * 4 + tq_ * HD * mitm
        return 2 * (q_b + kv_b + out_b + mask_b) + scratch

    budget = 40 * 1024 * 1024
    while _tile_bytes(TQ, TK) > budget and TQ % 256 == 0 and TQ > 128:
        TQ //= 2
    while _tile_bytes(TQ, TK) > budget and TK % 256 == 0 and TK > 128:
        TK //= 2
    nQ, nK = T // TQ, T // TK

    def _diag_block(qi):  # last KV block needed by query tile qi (causal)
        return (qi * TQ + TQ - 1) // TK

    if split:
        in_specs = [pl.BlockSpec((1, TQ, HD), lambda b, qi, ki: (b, qi, 0))]
        if causal:
            # Clamp the KV block index so skipped (above-diagonal) steps resolve
            # to the already-resident diagonal block -> no wasted DMA.
            def kv_idx(b, qi, ki, kv_block):
                return (b, jnp.minimum(ki, _diag_block(qi)), kv_block)
            in_specs += [
                pl.BlockSpec((1, TK, HD), functools.partial(kv_idx, kv_block=1)),
                pl.BlockSpec((1, TK, HD), functools.partial(kv_idx, kv_block=2)),
            ]
        else:
            in_specs += [
                pl.BlockSpec((1, TK, HD), lambda b, qi, ki: (b, ki, 1)),
                pl.BlockSpec((1, TK, HD), lambda b, qi, ki: (b, ki, 2)),
            ]
        args = [qkv, qkv, qkv]
    else:
        in_specs = [pl.BlockSpec((1, TQ, E), lambda b, qi, ki: (b, qi, 0))]
        if causal:
            def kv_idx_f(b, qi, ki):
                return (b, jnp.minimum(ki, _diag_block(qi)), 0)
            in_specs.append(pl.BlockSpec((1, TK, E), kv_idx_f))
        else:
            in_specs.append(pl.BlockSpec((1, TK, E), lambda b, qi, ki: (b, ki, 0)))
        args = [qkv, qkv]

    if not causal:
        # bool mask passed as int8 tiles (4x smaller than an f32 bias).
        in_specs.append(pl.BlockSpec((TQ, TK), lambda b, qi, ki: (qi, ki)))
        args.append(attn_mask.astype(jnp.int8))

    kernel = functools.partial(
        _flash_attend_kernel, H=H, D=D, TQ=TQ, TK=TK, split=split,
        causal=causal, scale=scale, mxu_dtype=mxu_dtype,
        exp_dtype=exp_dtype, precision=precision)

    out = pl.pallas_call(
        kernel,
        out_shape=jax.ShapeDtypeStruct((B, T, HD), qkv.dtype),
        grid_spec=pltpu.PrefetchScalarGridSpec(
            num_scalar_prefetch=0,
            grid=(B, nQ, nK),
            in_specs=in_specs,
            out_specs=pl.BlockSpec((1, TQ, HD), lambda b, qi, ki: (b, qi, 0)),
            scratch_shapes=[
                pltpu.VMEM((TQ, HD), mxu_dtype),      # hoisted scaled Q
                pltpu.VMEM((H, TQ, 1), jnp.float32),  # running max m
                pltpu.VMEM((H, TQ, 1), jnp.float32),  # running denom l
                pltpu.VMEM((H, TQ, D), jnp.float32),  # running accumulator
            ],
        ),
        compiler_params=pltpu.CompilerParams(
            # (B, nQ) parallel -> shards across v7x's two TensorCores.
            dimension_semantics=("parallel", "parallel", "arbitrary"),
            vmem_limit_bytes=48 * 1024 * 1024,
        ),
    )(*args)
    return out


def _reference(qkv, attn_mask, *, num_heads, head_dim, d_out):
    B, T, _ = qkv.shape
    H, D = num_heads, head_dim
    qkv5 = qkv.reshape(B, T, 3, H, D).transpose(2, 0, 3, 1, 4)
    q, k, v = qkv5[0], qkv5[1], qkv5[2]
    scores = jnp.einsum("bhqd,bhkd->bhqk", q, k,
                        precision=lax.Precision.HIGHEST) / math.sqrt(D)
    if attn_mask is None:
        attn_mask = jnp.tril(jnp.ones((T, T), dtype=jnp.bool_))
    scores = jnp.where(attn_mask[None, None], scores, -1e30)
    p = jax.nn.softmax(scores, axis=-1)
    ctx = jnp.einsum("bhqk,bhkd->bhqd", p, v, precision=lax.Precision.HIGHEST)
    return ctx.transpose(0, 2, 1, 3).reshape(B, T, d_out)


if __name__ == "__main__":
    key = jax.random.PRNGKey(0)
    k1, k2 = jax.random.split(key)

    # ---- Small shapes (B=2, T=8, H=2, D=16): H*D=32 not 128-aligned -> packed
    # full-E fallback path.
    B, T, H, D = 2, 8, 2, 16
    d_out = H * D
    qkv_s = jax.random.normal(k1, (B, T, 3 * H * D), dtype=jnp.float32)
    mask_s = jnp.tril(jnp.ones((T, T), dtype=jnp.bool_))
    ref_s = _reference(qkv_s, mask_s, num_heads=H, head_dim=D, d_out=d_out)

    # 1) explicit mask, f32 MXU -> tight check of the flash structure.
    out_f32 = attend_forward(qkv_s, mask_s, num_heads=H, head_dim=D,
                             d_out=d_out, mxu_dtype=jnp.float32)
    out_f32 = jax.block_until_ready(out_f32)
    assert out_f32.shape == (B, T, d_out)
    assert jnp.max(jnp.abs(out_f32 - ref_s)) < 1e-3

    # 2) explicit mask, default bf16 MXU + bf16 exp (perf config).
    out_bf16 = attend_forward(qkv_s, mask_s, num_heads=H, head_dim=D, d_out=d_out)
    out_bf16 = jax.block_until_ready(out_bf16)
    assert jnp.max(jnp.abs(out_bf16 - ref_s)) < 5e-2

    # 3) attn_mask=None -> is_causal=True (in-kernel iota mask), f32 tight.
    out_c = attend_forward(qkv_s, None, num_heads=H, head_dim=D, d_out=d_out,
                           mxu_dtype=jnp.float32)
    out_c = jax.block_until_ready(out_c)
    ref_c = _reference(qkv_s, None, num_heads=H, head_dim=D, d_out=d_out)
    assert jnp.max(jnp.abs(out_c - ref_c)) < 1e-3

    # ---- Larger aligned shapes (B=2, T=512, H=2, D=64): H*D=128 -> split Q/K/V
    # lane-blocked specs, multi-tile online softmax and causal DMA clamp.
    B2, T2, H2, D2 = 2, 512, 2, 64
    d_out2 = H2 * D2
    qkv_l = jax.random.normal(k2, (B2, T2, 3 * H2 * D2), dtype=jnp.float32)

    # 4) causal path, 2x2 (qi, ki) tiles -> exercises tile skipping + clamp.
    ref_lc = _reference(qkv_l, None, num_heads=H2, head_dim=D2, d_out=d_out2)
    out_lc = attend_forward(qkv_l, None, num_heads=H2, head_dim=D2, d_out=d_out2,
                            tq=256, tk=256, mxu_dtype=jnp.float32)
    out_lc = jax.block_until_ready(out_lc)
    assert jnp.max(jnp.abs(out_lc - ref_lc)) < 1e-3

    # 5) explicit random mask (no fully-masked rows), split path.
    mask_l = jax.random.bernoulli(jax.random.PRNGKey(1), 0.5, (T2, T2))
    mask_l = mask_l | jnp.eye(T2, dtype=jnp.bool_)
    ref_lm = _reference(qkv_l, mask_l, num_heads=H2, head_dim=D2, d_out=d_out2)
    out_lm = attend_forward(qkv_l, mask_l, num_heads=H2, head_dim=D2,
                            d_out=d_out2, tq=256, tk=256, mxu_dtype=jnp.float32)
    out_lm = jax.block_until_ready(out_lm)
    assert jnp.max(jnp.abs(out_lm - ref_lm)) < 1e-3

    print("KERNEL_OK")
</pallas_src>

<mosaic_0001>
module attributes {stable_mosaic.version = 11 : i64} {
  func.func @_flash_attend_kernel(%arg0: i32, %arg1: i32, %arg2: i32, %arg3: memref<1x8x96xf32, #tpu.memory_space<vmem>>, %arg4: memref<1x8x96xf32, #tpu.memory_space<vmem>>, %arg5: memref<8x8xi8, #tpu.memory_space<vmem>>, %arg6: memref<1x8x32xf32, #tpu.memory_space<vmem>>, %arg7: memref<8x32xf32, #tpu.memory_space<vmem>>, %arg8: memref<2x8x1xf32, #tpu.memory_space<vmem>>, %arg9: memref<2x8x1xf32, #tpu.memory_space<vmem>>, %arg10: memref<2x8x16xf32, #tpu.memory_space<vmem>>) attributes {dimension_semantics = [#tpu.dimension_semantics<parallel>, #tpu.dimension_semantics<parallel>, #tpu.dimension_semantics<arbitrary>], iteration_bounds = array<i64: 2, 1, 1>, scalar_prefetch = 0 : i64, scratch_operands = 4 : i64, tpu.core_type = #tpu.core_type<tc>, window_params = [{transform_indices = @transform_0, window_bounds = array<i64: 1, 8, 96>}, {transform_indices = @transform_1, window_bounds = array<i64: 1, 8, 96>}, {transform_indices = @transform_2, window_bounds = array<i64: 8, 8>}, {transform_indices = @transform_3, window_bounds = array<i64: 1, 8, 32>}]} {
    %c0_i32 = arith.constant 0 : i32
    %0 = arith.cmpi eq, %arg2, %c0_i32 : i32
    %1 = arith.extui %0 : i1 to i32
    %c0_i32_0 = arith.constant 0 : i32
    %2 = arith.cmpi ne, %1, %c0_i32_0 : i32
    scf.if %2 {
      %cst_59 = arith.constant 0xFF800000 : f32
      %87 = vector.broadcast %cst_59 : f32 to vector<2x8x1xf32>
      %c0_60 = arith.constant 0 : index
      %c0_61 = arith.constant 0 : index
      %c0_62 = arith.constant 0 : index
      %88 = vector.load %arg8[%c0_60, %c0_61, %c0_62] : memref<2x8x1xf32, #tpu.memory_space<vmem>>, vector<2x8x1xf32>
      tpu.vector_store %arg8[%c0_60, %c0_61, %c0_62], %87 {strides = array<i32>} : memref<2x8x1xf32, #tpu.memory_space<vmem>>, vector<2x8x1xf32>,
      %cst_63 = arith.constant 0.000000e+00 : f32
      %89 = vector.broadcast %cst_63 : f32 to vector<2x8x1xf32>
      %c0_64 = arith.constant 0 : index
      %c0_65 = arith.constant 0 : index
      %c0_66 = arith.constant 0 : index
      %90 = vector.load %arg9[%c0_64, %c0_65, %c0_66] : memref<2x8x1xf32, #tpu.memory_space<vmem>>, vector<2x8x1xf32>
      tpu.vector_store %arg9[%c0_64, %c0_65, %c0_66], %89 {strides = array<i32>} : memref<2x8x1xf32, #tpu.memory_space<vmem>>, vector<2x8x1xf32>,
      %cst_67 = arith.constant 0.000000e+00 : f32
      %91 = vector.broadcast %cst_67 : f32 to vector<2x8x16xf32>
      %c0_68 = arith.constant 0 : index
      %c0_69 = arith.constant 0 : index
      %c0_70 = arith.constant 0 : index
      %92 = vector.load %arg10[%c0_68, %c0_69, %c0_70] : memref<2x8x16xf32, #tpu.memory_space<vmem>>, vector<2x8x16xf32>
      tpu.vector_store %arg10[%c0_68, %c0_69, %c0_70], %91 {strides = array<i32>} : memref<2x8x16xf32, #tpu.memory_space<vmem>>, vector<2x8x16xf32>,
      %c0_71 = arith.constant 0 : index
      %c0_72 = arith.constant 0 : index
      %c0_73 = arith.constant 0 : index
      %93 = vector.load %arg3[%c0_71, %c0_72, %c0_73] : memref<1x8x96xf32, #tpu.memory_space<vmem>>, vector<1x8x32xf32>
      %94 = vector.shape_cast %93 : vector<1x8x32xf32> to vector<8x32xf32>
      %cst_74 = arith.constant 0.360673755 : f32
      %95 = vector.broadcast %cst_74 : f32 to vector<8x32xf32>
      %96 = arith.mulf %94, %95 : vector<8x32xf32>
      %c0_75 = arith.constant 0 : index
      %c0_76 = arith.constant 0 : index
      %97 = vector.load %arg7[%c0_75, %c0_76] : memref<8x32xf32, #tpu.memory_space<vmem>>, vector<8x32xf32>
      tpu.vector_store %arg7[%c0_75, %c0_76], %96 {strides = array<i32>} : memref<8x32xf32, #tpu.memory_space<vmem>>, vector<8x32xf32>,
    } else {
    }
    %c0 = arith.constant 0 : index
    %c0_1 = arith.constant 0 : index
    %3 = vector.load %arg5[%c0, %c0_1] : memref<8x8xi8, #tpu.memory_space<vmem>>, vector<8x8xi8>
    %c0_i8 = arith.constant 0 : i8
    %4 = vector.broadcast %c0_i8 : i8 to vector<8x8xi8>
    %5 = arith.cmpi ne, %3, %4 : vector<8x8xi8>
    %c0_2 = arith.constant 0 : index
    %c0_3 = arith.constant 0 : index
    %6 = vector.load %arg7[%c0_2, %c0_3] : memref<8x32xf32, #tpu.memory_space<vmem>>, vector<8x16xf32>
    %c0_4 = arith.constant 0 : index
    %c0_5 = arith.constant 0 : index
    %c32 = arith.constant 32 : index
    %7 = vector.load %arg4[%c0_4, %c0_5, %c32] : memref<1x8x96xf32, #tpu.memory_space<vmem>>, vector<1x8x16xf32>
    %8 = vector.shape_cast %7 : vector<1x8x16xf32> to vector<8x16xf32>
    %c0_6 = arith.constant 0 : index
    %c0_7 = arith.constant 0 : index
    %c64 = arith.constant 64 : index
    %9 = vector.load %arg4[%c0_6, %c0_7, %c64] : memref<1x8x96xf32, #tpu.memory_space<vmem>>, vector<1x8x16xf32>
    %10 = vector.shape_cast %9 : vector<1x8x16xf32> to vector<8x16xf32>
    %cst = arith.constant dense<0.000000e+00> : vector<8x8xf32>
    %11 = tpu.matmul %6, %8, %cst {dimension_numbers = #tpu.dot_dimension_numbers<[1], [1], [0], [0], [0, 0, 1, 0], [], []>, precision = #tpu.contract_precision<fp32>} : vector<8x16xf32>, vector<8x16xf32>, vector<8x8xf32> -> vector<8x8xf32>
    %cst_8 = arith.constant -1.000000e+30 : f32
    %12 = vector.broadcast %cst_8 : f32 to vector<8x8xf32>
    %13 = arith.select %5, %11, %12 : vector<8x8xi1>, vector<8x8xf32>
    %c0_9 = arith.constant 0 : index
    %c0_10 = arith.constant 0 : index
    %c0_11 = arith.constant 0 : index
    %14 = vector.load %arg8[%c0_9, %c0_10, %c0_11] : memref<2x8x1xf32, #tpu.memory_space<vmem>>, vector<1x8x1xf32>
    %15 = vector.shape_cast %14 : vector<1x8x1xf32> to vector<8x1xf32>
    %cst_12 = arith.constant dense<0xFF800000> : vector<8xf32>
    %16 = vector.multi_reduction <maximumf>, %13, %cst_12 [1] : vector<8x8xf32> to vector<8xf32>
    %17 = vector.shape_cast %16 : vector<8xf32> to vector<8x1xf32>
    %18 = arith.maximumf %15, %17 : vector<8x1xf32>
    %19 = arith.subf %15, %18 : vector<8x1xf32>
    %20 = math.exp2 %19 : vector<8x1xf32>
    %21 = vector.broadcast %18 : vector<8x1xf32> to vector<8x8xf32>
    %22 = arith.subf %13, %21 : vector<8x8xf32>
    %23 = math.exp2 %22 : vector<8x8xf32>
    %c0_13 = arith.constant 0 : index
    %c0_14 = arith.constant 0 : index
    %c0_15 = arith.constant 0 : index
    %24 = vector.load %arg9[%c0_13, %c0_14, %c0_15] : memref<2x8x1xf32, #tpu.memory_space<vmem>>, vector<1x8x1xf32>
    %25 = vector.shape_cast %24 : vector<1x8x1xf32> to vector<8x1xf32>
    %26 = arith.mulf %20, %25 : vector<8x1xf32>
    %cst_16 = arith.constant dense<0.000000e+00> : vector<8xf32>
    %27 = vector.multi_reduction <add>, %23, %cst_16 [1] : vector<8x8xf32> to vector<8xf32>
    %28 = vector.shape_cast %27 : vector<8xf32> to vector<8x1xf32>
    %29 = arith.addf %26, %28 : vector<8x1xf32>
    %c0_17 = arith.constant 0 : index
    %c0_18 = arith.constant 0 : index
    %c0_19 = arith.constant 0 : index
    %30 = vector.load %arg9[%c0_17, %c0_18, %c0_19] : memref<2x8x1xf32, #tpu.memory_space<vmem>>, vector<1x8x1xf32>
    %31 = vector.shape_cast %30 : vector<1x8x1xf32> to vector<8x1xf32>
    %32 = vector.shape_cast %29 : vector<8x1xf32> to vector<1x8x1xf32>
    tpu.vector_store %arg9[%c0_17, %c0_18, %c0_19], %32 {strides = array<i32>} : memref<2x8x1xf32, #tpu.memory_space<vmem>>, vector<1x8x1xf32>,
    %cst_20 = arith.constant dense<0.000000e+00> : vector<8x16xf32>
    %33 = tpu.matmul %23, %10, %cst_20 {dimension_numbers = #tpu.dot_dimension_numbers<[1], [0], [0], [1], [0, 0, 1, 1], [], []>, precision = #tpu.contract_precision<fp32>} : vector<8x8xf32>, vector<8x16xf32>, vector<8x16xf32> -> vector<8x16xf32>
    %c0_21 = arith.constant 0 : index
    %c0_22 = arith.constant 0 : index
    %c0_23 = arith.constant 0 : index
    %34 = vector.load %arg10[%c0_21, %c0_22, %c0_23] : memref<2x8x16xf32, #tpu.memory_space<vmem>>, vector<1x8x16xf32>
    %35 = vector.shape_cast %34 : vector<1x8x16xf32> to vector<8x16xf32>
    %36 = vector.broadcast %20 : vector<8x1xf32> to vector<8x16xf32>
    %37 = arith.mulf %36, %35 : vector<8x16xf32>
    %38 = arith.addf %37, %33 : vector<8x16xf32>
    %c0_24 = arith.constant 0 : index
    %c0_25 = arith.constant 0 : index
    %c0_26 = arith.constant 0 : index
    %39 = vector.load %arg10[%c0_24, %c0_25, %c0_26] : memref<2x8x16xf32, #tpu.memory_space<vmem>>, vector<1x8x16xf32>
    %40 = vector.shape_cast %39 : vector<1x8x16xf32> to vector<8x16xf32>
    %41 = vector.shape_cast %38 : vector<8x16xf32> to vector<1x8x16xf32>
    tpu.vector_store %arg10[%c0_24, %c0_25, %c0_26], %41 {strides = array<i32>} : memref<2x8x16xf32, #tpu.memory_space<vmem>>, vector<1x8x16xf32>,
    %c0_27 = arith.constant 0 : index
    %c0_28 = arith.constant 0 : index
    %c0_29 = arith.constant 0 : index
    %42 = vector.load %arg8[%c0_27, %c0_28, %c0_29] : memref<2x8x1xf32, #tpu.memory_space<vmem>>, vector<1x8x1xf32>
    %43 = vector.shape_cast %42 : vector<1x8x1xf32> to vector<8x1xf32>
    %44 = vector.shape_cast %18 : vector<8x1xf32> to vector<1x8x1xf32>
    tpu.vector_store %arg8[%c0_27, %c0_28, %c0_29], %44 {strides = array<i32>} : memref<2x8x1xf32, #tpu.memory_space<vmem>>, vector<1x8x1xf32>,
    %c0_30 = arith.constant 0 : index
    %c16 = arith.constant 16 : index
    %45 = vector.load %arg7[%c0_30, %c16] : memref<8x32xf32, #tpu.memory_space<vmem>>, vector<8x16xf32>
    %c0_31 = arith.constant 0 : index
    %c0_32 = arith.constant 0 : index
    %c48 = arith.constant 48 : index
    %46 = vector.load %arg4[%c0_31, %c0_32, %c48] : memref<1x8x96xf32, #tpu.memory_space<vmem>>, vector<1x8x16xf32>
    %47 = vector.shape_cast %46 : vector<1x8x16xf32> to vector<8x16xf32>
    %c0_33 = arith.constant 0 : index
    %c0_34 = arith.constant 0 : index
    %c80 = arith.constant 80 : index
    %48 = vector.load %arg4[%c0_33, %c0_34, %c80] : memref<1x8x96xf32, #tpu.memory_space<vmem>>, vector<1x8x16xf32>
    %49 = vector.shape_cast %48 : vector<1x8x16xf32> to vector<8x16xf32>
    %cst_35 = arith.constant dense<0.000000e+00> : vector<8x8xf32>
    %50 = tpu.matmul %45, %47, %cst_35 {dimension_numbers = #tpu.dot_dimension_numbers<[1], [1], [0], [0], [0, 0, 1, 0], [], []>, precision = #tpu.contract_precision<fp32>} : vector<8x16xf32>, vector<8x16xf32>, vector<8x8xf32> -> vector<8x8xf32>
    %cst_36 = arith.constant -1.000000e+30 : f32
    %51 = vector.broadcast %cst_36 : f32 to vector<8x8xf32>
    %52 = arith.select %5, %50, %51 : vector<8x8xi1>, vector<8x8xf32>
    %c1 = arith.constant 1 : index
    %c0_37 = arith.constant 0 : index
    %c0_38 = arith.constant 0 : index
    %53 = vector.load %arg8[%c1, %c0_37, %c0_38] : memref<2x8x1xf32, #tpu.memory_space<vmem>>, vector<1x8x1xf32>
    %54 = vector.shape_cast %53 : vector<1x8x1xf32> to vector<8x1xf32>
    %cst_39 = arith.constant dense<0xFF800000> : vector<8xf32>
    %55 = vector.multi_reduction <maximumf>, %52, %cst_39 [1] : vector<8x8xf32> to vector<8xf32>
    %56 = vector.shape_cast %55 : vector<8xf32> to vector<8x1xf32>
    %57 = arith.maximumf %54, %56 : vector<8x1xf32>
    %58 = arith.subf %54, %57 : vector<8x1xf32>
    %59 = math.exp2 %58 : vector<8x1xf32>
    %60 = vector.broadcast %57 : vector<8x1xf32> to vector<8x8xf32>
    %61 = arith.subf %52, %60 : vector<8x8xf32>
    %62 = math.exp2 %61 : vector<8x8xf32>
    %c1_40 = arith.constant 1 : index
    %c0_41 = arith.constant 0 : index
    %c0_42 = arith.constant 0 : index
    %63 = vector.load %arg9[%c1_40, %c0_41, %c0_42] : memref<2x8x1xf32, #tpu.memory_space<vmem>>, vector<1x8x1xf32>
    %64 = vector.shape_cast %63 : vector<1x8x1xf32> to vector<8x1xf32>
    %65 = arith.mulf %59, %64 : vector<8x1xf32>
    %cst_43 = arith.constant dense<0.000000e+00> : vector<8xf32>
    %66 = vector.multi_reduction <add>, %62, %cst_43 [1] : vector<8x8xf32> to vector<8xf32>
    %67 = vector.shape_cast %66 : vector<8xf32> to vector<8x1xf32>
    %68 = arith.addf %65, %67 : vector<8x1xf32>
    %c1_44 = arith.constant 1 : index
    %c0_45 = arith.constant 0 : index
    %c0_46 = arith.constant 0 : index
    %69 = vector.load %arg9[%c1_44, %c0_45, %c0_46] : memref<2x8x1xf32, #tpu.memory_space<vmem>>, vector<1x8x1xf32>
    %70 = vector.shape_cast %69 : vector<1x8x1xf32> to vector<8x1xf32>
    %71 = vector.shape_cast %68 : vector<8x1xf32> to vector<1x8x1xf32>
    tpu.vector_store %arg9[%c1_44, %c0_45, %c0_46], %71 {strides = array<i32>} : memref<2x8x1xf32, #tpu.memory_space<vmem>>, vector<1x8x1xf32>,
    %cst_47 = arith.constant dense<0.000000e+00> : vector<8x16xf32>
    %72 = tpu.matmul %62, %49, %cst_47 {dimension_numbers = #tpu.dot_dimension_numbers<[1], [0], [0], [1], [0, 0, 1, 1], [], []>, precision = #tpu.contract_precision<fp32>} : vector<8x8xf32>, vector<8x16xf32>, vector<8x16xf32> -> vector<8x16xf32>
    %c1_48 = arith.constant 1 : index
    %c0_49 = arith.constant 0 : index
    %c0_50 = arith.constant 0 : index
    %73 = vector.load %arg10[%c1_48, %c0_49, %c0_50] : memref<2x8x16xf32, #tpu.memory_space<vmem>>, vector<1x8x16xf32>
    %74 = vector.shape_cast %73 : vector<1x8x16xf32> to vector<8x16xf32>
    %75 = vector.broadcast %59 : vector<8x1xf32> to vector<8x16xf32>
    %76 = arith.mulf %75, %74 : vector<8x16xf32>
    %77 = arith.addf %76, %72 : vector<8x16xf32>
    %c1_51 = arith.constant 1 : index
    %c0_52 = arith.constant 0 : index
    %c0_53 = arith.constant 0 : index
    %78 = vector.load %arg10[%c1_51, %c0_52, %c0_53] : memref<2x8x16xf32, #tpu.memory_space<vmem>>, vector<1x8x16xf32>
    %79 = vector.shape_cast %78 : vector<1x8x16xf32> to vector<8x16xf32>
    %80 = vector.shape_cast %77 : vector<8x16xf32> to vector<1x8x16xf32>
    tpu.vector_store %arg10[%c1_51, %c0_52, %c0_53], %80 {strides = array<i32>} : memref<2x8x16xf32, #tpu.memory_space<vmem>>, vector<1x8x16xf32>,
    %c1_54 = arith.constant 1 : index
    %c0_55 = arith.constant 0 : index
    %c0_56 = arith.constant 0 : index
    %81 = vector.load %arg8[%c1_54, %c0_55, %c0_56] : memref<2x8x1xf32, #tpu.memory_space<vmem>>, vector<1x8x1xf32>
    %82 = vector.shape_cast %81 : vector<1x8x1xf32> to vector<8x1xf32>
    %83 = vector.shape_cast %57 : vector<8x1xf32> to vector<1x8x1xf32>
    tpu.vector_store %arg8[%c1_54, %c0_55, %c0_56], %83 {strides = array<i32>} : memref<2x8x1xf32, #tpu.memory_space<vmem>>, vector<1x8x1xf32>,
    %c0_i32_57 = arith.constant 0 : i32
    %84 = arith.cmpi eq, %arg2, %c0_i32_57 : i32
    %85 = arith.extui %84 : i1 to i32
    %c0_i32_58 = arith.constant 0 : i32
    %86 = arith.cmpi ne, %85, %c0_i32_58 : i32
    scf.if %86 {
      %c0_59 = arith.constant 0 : index
      %c0_60 = arith.constant 0 : index
      %c0_61 = arith.constant 0 : index
      %87 = vector.load %arg10[%c0_59, %c0_60, %c0_61] : memref<2x8x16xf32, #tpu.memory_space<vmem>>, vector<1x8x16xf32>
      %88 = vector.shape_cast %87 : vector<1x8x16xf32> to vector<8x16xf32>
      %c0_62 = arith.constant 0 : index
      %c0_63 = arith.constant 0 : index
      %c0_64 = arith.constant 0 : index
      %89 = vector.load %arg9[%c0_62, %c0_63, %c0_64] : memref<2x8x1xf32, #tpu.memory_space<vmem>>, vector<1x8x1xf32>
      %90 = vector.shape_cast %89 : vector<1x8x1xf32> to vector<8x1xf32>
      %91 = vector.broadcast %90 : vector<8x1xf32> to vector<8x16xf32>
      %92 = arith.divf %88, %91 : vector<8x16xf32>
      %c1_65 = arith.constant 1 : index
      %c0_66 = arith.constant 0 : index
      %c0_67 = arith.constant 0 : index
      %93 = vector.load %arg10[%c1_65, %c0_66, %c0_67] : memref<2x8x16xf32, #tpu.memory_space<vmem>>, vector<1x8x16xf32>
      %94 = vector.shape_cast %93 : vector<1x8x16xf32> to vector<8x16xf32>
      %c1_68 = arith.constant 1 : index
      %c0_69 = arith.constant 0 : index
      %c0_70 = arith.constant 0 : index
      %95 = vector.load %arg9[%c1_68, %c0_69, %c0_70] : memref<2x8x1xf32, #tpu.memory_space<vmem>>, vector<1x8x1xf32>
      %96 = vector.shape_cast %95 : vector<1x8x1xf32> to vector<8x1xf32>
      %97 = vector.broadcast %96 : vector<8x1xf32> to vector<8x16xf32>
      %98 = arith.divf %94, %97 : vector<8x16xf32>
      %99 = tpu.concatenate %92, %98 in 1 : vector<8x16xf32>, vector<8x16xf32> -> vector<8x32xf32>
      %c0_71 = arith.constant 0 : index
      %c0_72 = arith.constant 0 : index
      %c0_73 = arith.constant 0 : index
      %100 = vector.load %arg6[%c0_71, %c0_72, %c0_73] : memref<1x8x32xf32, #tpu.memory_space<vmem>>, vector<1x8x32xf32>
      %101 = vector.shape_cast %100 : vector<1x8x32xf32> to vector<8x32xf32>
      %102 = vector.shape_cast %99 : vector<8x32xf32> to vector<1x8x32xf32>
      tpu.vector_store %arg6[%c0_71, %c0_72, %c0_73], %102 {strides = array<i32>} : memref<1x8x32xf32, #tpu.memory_space<vmem>>, vector<1x8x32xf32>,
    } else {
    }
    return
  }
  func.func @transform_0(%arg0: i32, %arg1: i32, %arg2: i32) -> (i32, i32, i32) {
    %c0_i32 = arith.constant 0 : i32
    %c0_i32_0 = arith.constant 0 : i32
    return %arg0, %arg1, %c0_i32 : i32, i32, i32
  }
  func.func @transform_1(%arg0: i32, %arg1: i32, %arg2: i32) -> (i32, i32, i32) {
    %c0_i32 = arith.constant 0 : i32
    %c0_i32_0 = arith.constant 0 : i32
    return %arg0, %arg2, %c0_i32 : i32, i32, i32
  }
  func.func @transform_2(%arg0: i32, %arg1: i32, %arg2: i32) -> (i32, i32) {
    %c0_i32 = arith.constant 0 : i32
    return %arg1, %arg2 : i32, i32
  }
  func.func @transform_3(%arg0: i32, %arg1: i32, %arg2: i32) -> (i32, i32, i32) {
    %c0_i32 = arith.constant 0 : i32
    %c0_i32_0 = arith.constant 0 : i32
    return %arg0, %arg1, %c0_i32 : i32, i32, i32
  }
}

</mosaic_0001>

<llo_original>
// kernel: tpu_custom_call.1
$region0: #{tpu_custom_call.1}
  #allocation0 [shape = 'u32[]', space=smem, size = 0x4, offset = 0x4, fixed_abs, tag = 'smem constant byte address 0x4 - core index']
  #allocation1 [shape = 'u32[144,128]{1,0:T(1,128)}', space=vmem, size = 0x12000, scoped, tag = 'internal scratch']
  #allocation2 [shape = 'f32[8,32]{1,0:T(8,128)}', space=vmem, size = 0x1000, scoped, tag = 'scratch operand']
  #allocation3 [shape = 'f32[2,8,1]{2,1,0:T(8,128)}', space=vmem, size = 0x2000, scoped, tag = 'scratch operand']
  #allocation4 [shape = 'f32[2,8,1]{2,1,0:T(8,128)}', space=vmem, size = 0x2000, scoped, tag = 'scratch operand']
  #allocation5 [shape = 'f32[2,8,16]{2,1,0:T(8,128)}', space=vmem, size = 0x2000, scoped, tag = 'scratch operand']
  %s0 = inlined_call_operand.hbm [shape: f32[2,8,96], index: 0, kind: input, shape index: {}]
  %s1 = inlined_call_operand.hbm [shape: f32[2,8,96], index: 1, kind: input, shape index: {}]
  %s2 = inlined_call_operand.vmem [shape: s8[8,8], index: 2, kind: input, shape index: {}]
  %s3 = inlined_call_operand.hbm [shape: f32[2,8,32], index: 3, kind: output, shape index: {}]
  %s4 = sld [smem:[#allocation0]]
  $region61: #{tpu_custom_call.1} parent=0
    _
  %s6 = ssub.s32 1, %s4
  %s7 = scalar_select 0, %s6, %s4
  $region1: #{tpu_custom_call.1} parent=0
    #allocation6 [shape = 'u8[8192]{0}', space=vmem, size = 0x2000, scoped, tag = 'input window, operand 0']
    #allocation7 [shape = 's32[2]{0}', space=sflag, size = 0x8, scoped, tag = 'scoped memory for tpu_custom_call.1']
    #allocation8 [shape = 's32[2]{0}', space=sflag, size = 0x8, scoped, tag = 'scoped memory for tpu_custom_call.1']
    #allocation9 [shape = 'u8[8192]{0}', space=vmem, size = 0x2000, scoped, tag = 'input window, operand 1']
    #allocation10 [shape = 's32[2]{0}', space=sflag, size = 0x8, scoped, tag = 'scoped memory for tpu_custom_call.1']
    #allocation11 [shape = 'u8[8192]{0}', space=vmem, size = 0x2000, scoped, tag = 'output window, operand 0']
    %8 = vsyncpa [#allocation7], 0
    %s9 = scalar_lea.sflag [#allocation7], 1
    %10 = vsyncpa %s9, 0
    %11 = vsyncpa [#allocation10], 0
    %s12 = scalar_lea.sflag [#allocation10], 1
    %13 = vsyncpa %s12, 0
    %14 = vsyncpa [#allocation8], 0
    %s15 = scalar_lea.sflag [#allocation8], 1
    %16 = vsyncpa %s15, 0
    loop: start=0, step=1, limit=4
    $region2: #{tpu_custom_call.1} parent=1 // loop_pre_header
      _
    $region3: #{tpu_custom_call.1} parent=1 // loop_header
      %s18 = sphi 0, %s22
      %p19 = scmp.ge.s32.totalorder %s18, 4
      %s25 = sphi 0, %s44
      %s26 = sphi 0, %s40
      %s27 = sphi 0, %s36
      %s28 = sphi 0, %s25
      %s29 = sphi 0, %s26
      %s30 = sphi 0, %s27
      %s31 = sphi 0, %s28
      %s32 = sphi 0, %s29
      %s33 = sphi 0, %s30
      %s49 = sphi 0, %s51
      %s52 = sphi 0, %s49
      %s53 = sphi 0, %s52
      %s69 = sphi 0, %s53
      %s77 = sphi 0, %s79
      %s80 = sphi 0, %s77
      %s81 = sphi 0, %s80
      %s97 = sphi 0, %s81
      %s105 = sphi 0, %s107
      %s108 = sphi 0, %s105
      %s109 = sphi 0, %s108
      %s125 = sphi 0, %s109
      %s133 = sphi 0, %s135
      %s136 = sphi 0, %s133
      %s137 = sphi 0, %s136
      %s153 = sphi 0, %s137
    $region4: #{tpu_custom_call.1} parent=1 // loop_header_branch
      %21 = sbr.rel (%p19) target = $region8
    $region5: #{tpu_custom_call.1} parent=1 // loop_body
      %s23 = ssub.s32 %s18, 1
      %s24 = ssub.s32 %s18, 2
      %s34 = sadd.s32 1, %s27
      %p35 = scmp.ge.s32.totalorder %s34, 1
      %s36 = scalar_select %p35, 0, %s34
      %s37 = sadd.s32 1, %s26
      %s38 = scalar_select %p35, %s37, %s26
      %p39 = scmp.ge.s32.totalorder %s38, 1
      %s40 = scalar_select %p39, 0, %s38
      %s41 = sadd.s32 1, %s25
      %s42 = scalar_select %p39, %s41, %s25
      %p43 = scmp.ge.s32.totalorder %s42, 2
      %s44 = scalar_select %p43, 0, %s42
      %s45 = ssub.s32 %s25, %s44
      %s46 = ssub.s32 %s26, %s40
      %s47 = sor.u32 %s45, %s46
      %p48 = scmp.eq.s32.totalorder %s47, 0
      %s50 = sadd.s32 %s49, 1
      %s51 = scalar_select %p48, %s49, %s50
      %p54 = pneg %p48
      %p55 = scmp.eq.s32.totalorder %s18, 1
      %p56 = por %p54, %p55
      %p57 = scmp.ne.s32.totalorder %s49, %s52
      %p58 = scmp.eq.s32.totalorder %s18, 0
      %p59 = por %p57, %p58
      %p60 = scmp.ne.s32.totalorder %s49, %s52
      %p61 = scmp.eq.s32.totalorder %s23, 1
      %p62 = por %p60, %p61
      %p63 = scmp.ne.s32.totalorder %s52, %s53
      %p64 = scmp.eq.s32.totalorder %s23, 0
      %p65 = por %p63, %p64
      %p66 = scmp.ne.s32.totalorder %s52, %s53
      %p67 = scmp.eq.s32.totalorder %s24, 1
      %p68 = por %p66, %p67
      %p70 = scmp.ne.s32.totalorder %s53, %s69
      %p71 = scmp.eq.s32.totalorder %s24, 0
      %p72 = por %p70, %p71
      %s73 = ssub.s32 %s25, %s44
      %s74 = ssub.s32 %s27, %s36
      %s75 = sor.u32 %s73, %s74
      %p76 = scmp.eq.s32.totalorder %s75, 0
      %s78 = sadd.s32 %s77, 1
      %s79 = scalar_select %p76, %s77, %s78
      %p82 = pneg %p76
      %p83 = scmp.eq.s32.totalorder %s18, 1
      %p84 = por %p82, %p83
      %p85 = scmp.ne.s32.totalorder %s77, %s80
      %p86 = scmp.eq.s32.totalorder %s18, 0
      %p87 = por %p85, %p86
      %p88 = scmp.ne.s32.totalorder %s77, %s80
      %p89 = scmp.eq.s32.totalorder %s23, 1
      %p90 = por %p88, %p89
      %p91 = scmp.ne.s32.totalorder %s80, %s81
      %p92 = scmp.eq.s32.totalorder %s23, 0
      %p93 = por %p91, %p92
      %p94 = scmp.ne.s32.totalorder %s80, %s81
      %p95 = scmp.eq.s32.totalorder %s24, 1
      %p96 = por %p94, %p95
      %p98 = scmp.ne.s32.totalorder %s81, %s97
      %p99 = scmp.eq.s32.totalorder %s24, 0
      %p100 = por %p98, %p99
      %s101 = ssub.s32 %s26, %s40
      %s102 = ssub.s32 %s27, %s36
      %s103 = sor.u32 %s101, %s102
      %p104 = scmp.eq.s32.totalorder %s103, 0
      %s106 = sadd.s32 %s105, 1
      %s107 = scalar_select %p104, %s105, %s106
      %p110 = pneg %p104
      %p111 = scmp.eq.s32.totalorder %s18, 1
      %p112 = por %p110, %p111
      %p113 = scmp.ne.s32.totalorder %s105, %s108
      %p114 = scmp.eq.s32.totalorder %s18, 0
      %p115 = por %p113, %p114
      %p116 = scmp.ne.s32.totalorder %s105, %s108
      %p117 = scmp.eq.s32.totalorder %s23, 1
      %p118 = por %p116, %p117
      %p119 = scmp.ne.s32.totalorder %s108, %s109
      %p120 = scmp.eq.s32.totalorder %s23, 0
      %p121 = por %p119, %p120
      %p122 = scmp.ne.s32.totalorder %s108, %s109
      %p123 = scmp.eq.s32.totalorder %s24, 1
      %p124 = por %p122, %p123
      %p126 = scmp.ne.s32.totalorder %s109, %s125
      %p127 = scmp.eq.s32.totalorder %s24, 0
      %p128 = por %p126, %p127
      %s129 = ssub.s32 %s25, %s44
      %s130 = ssub.s32 %s26, %s40
      %s131 = sor.u32 %s129, %s130
      %p132 = scmp.eq.s32.totalorder %s131, 0
      %s134 = sadd.s32 %s133, 1
      %s135 = scalar_select %p132, %s133, %s134
      %p138 = pneg %p132
      %p139 = scmp.eq.s32.totalorder %s18, 1
      %p140 = por %p138, %p139
      %p141 = scmp.ne.s32.totalorder %s133, %s136
      %p142 = scmp.eq.s32.totalorder %s18, 0
      %p143 = por %p141, %p142
      %p144 = scmp.ne.s32.totalorder %s133, %s136
      %p145 = scmp.eq.s32.totalorder %s23, 1
      %p146 = por %p144, %p145
      %p147 = scmp.ne.s32.totalorder %s136, %s137
      %p148 = scmp.eq.s32.totalorder %s23, 0
      %p149 = por %p147, %p148
      %p150 = scmp.ne.s32.totalorder %s136, %s137
      %p151 = scmp.eq.s32.totalorder %s24, 1
      %p152 = por %p150, %p151
      %p154 = scmp.ne.s32.totalorder %s137, %s153
      %p155 = scmp.eq.s32.totalorder %s24, 0
      %p156 = por %p154, %p155
      %p157 = scmp.le.s32.totalorder 1, %s18
      %p158 = scmp.lt.s32.totalorder %s18, 3
      %p159 = pnand %p157, %p158
      %p160 = pneg %p159
      // Predicated region
      $region9: #{tpu_custom_call.1} parent=5 // pred_check
        _
      $region10: #{tpu_custom_call.1} parent=5 // pred_check_branch
        %162 = sbr.rel (%p159) target = $region12
      $region11: #{tpu_custom_call.1} parent=5 // pred_region
        %s163 = ssub.s32 %s18, 1
        // Predicated region
        $region13: #{tpu_custom_call.1} parent=11 // pred_check
          %p164 = pneg %p121
        $region14: #{tpu_custom_call.1} parent=11 // pred_check_branch
          %166 = sbr.rel (%p164) target = $region16
        $region15: #{tpu_custom_call.1} parent=11 // pred_region
          %p167 = scmp.lt.s32.totalorder %s29, 0
          %s168 = scalar_select %p167, %s29, 0
          %p169 = scmp.lt.s32.totalorder %s30, 0
          %s170 = scalar_select %p169, %s30, 0
          %s171 = sadd.s32 %s170, %s168
          %s172 = smul.addr %s171, 2
          %s173 = scalar_lea.vmem %s2, %s172
        $region16: #{tpu_custom_call.1} parent=11 // pred_fallthru
          _
      $region12: #{tpu_custom_call.1} parent=5 // pred_fallthru
        _
      %p174 = scmp.lt.s32.totalorder %s18, 2
      // Predicated region
      $region17: #{tpu_custom_call.1} parent=5 // pred_check
        %p175 = pneg %p174
      $region18: #{tpu_custom_call.1} parent=5 // pred_check_branch
        %177 = sbr.rel (%p175) target = $region20
      $region19: #{tpu_custom_call.1} parent=5 // pred_region
        // Predicated region
        $region21: #{tpu_custom_call.1} parent=19 // pred_check
          %p178 = pneg %p59
        $region22: #{tpu_custom_call.1} parent=19 // pred_check_branch
          %180 = sbr.rel (%p178) target = $region24
        $region23: #{tpu_custom_call.1} parent=19 // pred_region
          %s181 = sand.u32 %s49, 1
          %s182 = scalar_lea.sflag [#allocation7], %s181
          %s183 = sand.u32 %s49, 1
          %s184 = smul.addr %s183, 8
          %s185 = scalar_lea.vmem [#allocation6], %s184
          %s187 = ssub.s32 128, 128
          %188 = vsyncadd %s182, %s187
          %s189 = sadd.s32 %s26, %s25
          %s190 = smul.addr %s189, 128
          %s191 = scalar_lea.hbm %s0, %s190
          %s193 = sshll.u32 %s185, 4
          %s194 = int_to_ptr.vmem [resolvable:$true] %s193
          %196 = dma.hbm_to_vmem [thread:$0]  %s191, 128, %s194, %s182
        $region24: #{tpu_custom_call.1} parent=19 // pred_fallthru
          _
        // Predicated region
        $region25: #{tpu_custom_call.1} parent=19 // pred_check
          %p197 = pneg %p87
        $region26: #{tpu_custom_call.1} parent=19 // pred_check_branch
          %199 = sbr.rel (%p197) target = $region28
        $region27: #{tpu_custom_call.1} parent=19 // pred_region
          %s200 = sand.u32 %s77, 1
          %s201 = scalar_lea.sflag [#allocation10], %s200
          %s202 = sand.u32 %s77, 1
          %s203 = smul.addr %s202, 8
          %s204 = scalar_lea.vmem [#allocation9], %s203
          %s206 = ssub.s32 128, 128
          %207 = vsyncadd %s201, %s206
          %s208 = sadd.s32 %s27, %s25
          %s209 = smul.addr %s208, 128
          %s210 = scalar_lea.hbm %s1, %s209
          %s212 = sshll.u32 %s204, 4
          %s213 = int_to_ptr.vmem [resolvable:$true] %s212
          %215 = dma.hbm_to_vmem [thread:$0]  %s210, 128, %s213, %s201
        $region28: #{tpu_custom_call.1} parent=19 // pred_fallthru
          _
      $region20: #{tpu_custom_call.1} parent=5 // pred_fallthru
        _
      %p216 = scmp.le.s32.totalorder 1, %s18
      %p217 = scmp.lt.s32.totalorder %s18, 3
      %p218 = pnand %p216, %p217
      %p219 = pneg %p218
      // Predicated region
      $region29: #{tpu_custom_call.1} parent=5 // pred_check
        _
      $region30: #{tpu_custom_call.1} parent=5 // pred_check_branch
        %221 = sbr.rel (%p218) target = $region32
      $region31: #{tpu_custom_call.1} parent=5 // pred_region
        %s222 = ssub.s32 %s18, 1
        %s223 = sand.u32 %s52, 1
        %s224 = scalar_lea.sflag [#allocation7], %s223
        %s225 = sand.u32 %s52, 1
        %s226 = smul.addr %s225, 8
        %s227 = scalar_lea.vmem [#allocation6], %s226
        // Predicated region
        $region33: #{tpu_custom_call.1} parent=31 // pred_check
          %p228 = pneg %p65
        $region34: #{tpu_custom_call.1} parent=31 // pred_check_branch
          %230 = sbr.rel (%p228) target = $region36
        $region35: #{tpu_custom_call.1} parent=31 // pred_region
          %231 = dma.done %s224, 128
        $region36: #{tpu_custom_call.1} parent=31 // pred_fallthru
          _
        %s232 = sand.u32 %s80, 1
        %s233 = scalar_lea.sflag [#allocation10], %s232
        %s234 = sand.u32 %s80, 1
        %s235 = smul.addr %s234, 8
        %s236 = scalar_lea.vmem [#allocation9], %s235
        // Predicated region
        $region37: #{tpu_custom_call.1} parent=31 // pred_check
          %p237 = pneg %p93
        $region38: #{tpu_custom_call.1} parent=31 // pred_check_branch
          %239 = sbr.rel (%p237) target = $region40
        $region39: #{tpu_custom_call.1} parent=31 // pred_region
          %240 = dma.done %s233, 128
        $region40: #{tpu_custom_call.1} parent=31 // pred_fallthru
          _
        %s241 = sand.u32 %s52, 1
        %s242 = scalar_lea.sflag [#allocation7], %s241
        %s243 = sand.u32 %s52, 1
        %s244 = smul.addr %s243, 8
        %s245 = scalar_lea.vmem [#allocation6], %s244
        %p246 = pneg %p65
        %p247 = pneg %p62
        %s248 = sand.u32 %s80, 1
        %s249 = scalar_lea.sflag [#allocation10], %s248
        %s250 = sand.u32 %s80, 1
        %s251 = smul.addr %s250, 8
        %s252 = scalar_lea.vmem [#allocation9], %s251
        %p253 = pneg %p93
        %p254 = pneg %p90
        %p255 = scmp.lt.s32.totalorder %s29, 0
        %s256 = scalar_select %p255, %s29, 0
        %p257 = scmp.lt.s32.totalorder %s30, 0
        %s258 = scalar_select %p257, %s30, 0
        %s259 = sadd.s32 %s258, %s256
        %s260 = smul.addr %s259, 2
        %s261 = scalar_lea.vmem %s2, %s260
        %p262 = pneg %p121
        %p263 = pneg %p118
        %p264 = pneg %p149
        %p265 = pneg %p146
        %s266 = sand.u32 %s136, 1
        %s267 = scalar_lea.sflag [#allocation8], %s266
        %s268 = sand.u32 %s136, 1
        %s269 = smul.addr %s268, 8
        %s270 = scalar_lea.vmem [#allocation11], %s269
        %p271 = scmp.lt.s32.totalorder %s29, 0
        %s272 = scalar_select %p271, %s29, 0
        %p273 = scmp.lt.s32.totalorder %s30, 0
        %s274 = scalar_select %p273, %s30, 0
        %s275 = sadd.s32 %s274, %s272
        %s276 = smul.addr %s275, 2
        %s277 = scalar_lea.vmem %s2, %s276
        %p280 = scmp.eq.s32.totalorder %s30, 0
        // Predicated region
        $region41: #{tpu_custom_call.1} parent=31 // pred_check
          %p281 = pneg %p280
        $region42: #{tpu_custom_call.1} parent=31 // pred_check_branch
          %283 = sbr.rel (%p281) target = $region44
        $region43: #{tpu_custom_call.1} parent=31 // pred_region
          %vm284 = vcmask 7168
          %285 = vst.msk [vmem:[#allocation3] sm:$0xff] %vm284, -inf
          %286 = vst.msk [vmem:[#allocation3 + $0x8] sm:$0xff] %vm284, -inf
          %287 = vst.msk [vmem:[#allocation4] sm:$0xff] %vm284, 0.0
          %288 = vst.msk [vmem:[#allocation4 + $0x8] sm:$0xff] %vm284, 0.0
          %vm289 = vcmask 130048
          %290 = vst.msk [vmem:[#allocation5] sm:$0xff] %vm289, 0.0
          %291 = vst.msk [vmem:[#allocation5 + $0x8] sm:$0xff] %vm289, 0.0
          %v292 = vld [vmem:[%s227] sm:$0xff]
          %v293 = vmul.f32 %v292, 0.36067376
          %vm294 = vcmask 261120
          %295 = vst.msk [vmem:[#allocation2] sm:$0xff] %vm294, %v293
        $region44: #{tpu_custom_call.1} parent=31 // pred_fallthru
          _
        %v296 = vld [vmem:[%s277] sm:$0x3]
        %vm297 = vnez %v296
        %v298 = vld [vmem:[#allocation2] sm:$0xff]
        %v299 = vld [vmem:[%s236] sm:$0xff]
        %301 = vrot.lane.b32.xlu0 %v299, 96
        %v302 = vpop.permute.xlu0 %301
        %vm303 = vcmask 130048
        %v305 = vsel %vm303, %v298, 0
        %v307 = vsel %vm303, %v302, 0
        %309 = vmatprep.subr.mxu0 0.0
        %v310 = vand.u32 %v307, 4294901760
        %311 = vmatpush1.xpose.msra.mxu0 %v310
        %312 = vmatprep.subr.mxu0 0.0
        %313 = vmatpush1.xpose.msra.mxu0 0.0
        %314 = vmatprep.subr.mxu0 0.0
        %315 = vmatpush1.xpose.msra.mxu0 0.0
        %316 = vmatprep.subr.mxu0 0.0
        %317 = vmatpush1.xpose.msra.mxu0 0.0
        %318 = vmatprep.subr.mxu0 0.0
        %319 = vmatpush1.xpose.msra.mxu0 0.0
        %320 = vmatprep.subr.mxu0 0.0
        %321 = vmatpush1.xpose.msra.mxu0 0.0
        %322 = vmatprep.subr.mxu0 0.0
        %323 = vmatpush1.xpose.msra.mxu0 0.0
        %324 = vmatprep.subr.mxu0 0.0
        %325 = vmatpush1.xpose.msra.mxu0 0.0
        %326 = vmatprep.subr.mxu0 0.0
        %327 = vmatpush1.xpose.msra.mxu0 0.0
        %328 = vmatprep.subr.mxu0 0.0
        %329 = vmatpush1.xpose.msra.mxu0 0.0
        %330 = vmatprep.subr.mxu0 0.0
        %331 = vmatpush1.xpose.msra.mxu0 0.0
        %332 = vmatprep.subr.mxu0 0.0
        %333 = vmatpush1.xpose.msra.mxu0 0.0
        %334 = vmatprep.subr.mxu0 0.0
        %335 = vmatpush1.xpose.msra.mxu0 0.0
        %336 = vmatprep.subr.mxu0 0.0
        %337 = vmatpush1.xpose.msra.mxu0 0.0
        %338 = vmatprep.subr.mxu0 0.0
        %339 = vmatpush1.xpose.msra.mxu0 0.0
        %340 = vmatprep.subr.mxu0 0.0
        %341 = vmatpush1.xpose.msra.mxu0 0.0
        %342 = vmatprep.subr.mxu0 0.0
        %343 = vmatpush1.xpose.msra.mxu0 0.0
        %344 = vmatprep.subr.mxu0 0.0
        %345 = vmatpush1.xpose.msra.mxu0 0.0
        %346 = vmatprep.subr.mxu0 0.0
        %347 = vmatpush1.xpose.msra.mxu0 0.0
        %348 = vmatprep.subr.mxu0 0.0
        %349 = vmatpush1.xpose.msra.mxu0 0.0
        %350 = vmatprep.subr.mxu0 0.0
        %351 = vmatpush1.xpose.msra.mxu0 0.0
        %352 = vmatprep.subr.mxu0 0.0
        %353 = vmatpush1.xpose.msra.mxu0 0.0
        %354 = vmatprep.subr.mxu0 0.0
        %355 = vmatpush1.xpose.msra.mxu0 0.0
        %356 = vmatprep.subr.mxu0 0.0
        %357 = vmatpush1.xpose.msra.mxu0 0.0
        %358 = vmatprep.subr.mxu0 0.0
        %359 = vmatpush1.xpose.msra.mxu0 0.0
        %360 = vmatprep.subr.mxu0 0.0
        %361 = vmatpush1.xpose.msra.mxu0 0.0
        %362 = vmatprep.subr.mxu0 0.0
        %363 = vmatpush1.xpose.msra.mxu0 0.0
        %364 = vmatprep.subr.mxu0 0.0
        %365 = vmatpush1.xpose.msra.mxu0 0.0
        %366 = vmatprep.subr.mxu0 0.0
        %367 = vmatpush1.xpose.msra.mxu0 0.0
        %368 = vmatprep.subr.mxu0 0.0
        %369 = vmatpush1.xpose.msra.mxu0 0.0
        %370 = vmatprep.subr.mxu0 0.0
        %371 = vmatpush1.xpose.msra.mxu0 0.0
        %372 = vmatprep.subr.mxu0 0.0
        %373 = vmatpush1.xpose.msra.mxu0 0.0
        %374 = vmatprep.mubr.f32.mxu0 0.0
        %v375 = vand.u32 %v305, 4294901760
        %v376 = vsub.f32 %v305, %v375
        %v377 = vand.u32 %v376, 4294901760
        %v378 = vsub.f32 %v376, %v377
        %v379 = vand.u32 %v378, 4294901760
        %380 = vmatmul.mubr.f32.gmra.mrb[0].mxu0 %v379
        %v381 = vpop.f32.mrb[0].mxu0
        %v382 = vadd.f32 0.0, %v381
        %v383 = vpop.f32.mrb[0].mxu0
        %384 = vdwg.mxu0
        %385 = vmatprep.subr.mxu0 0.0
        %v386 = vand.u32 %v307, 4294901760
        %v387 = vsub.f32 %v307, %v386
        %v388 = vand.u32 %v387, 4294901760
        %v389 = vsub.f32 %v387, %v388
        %v390 = vand.u32 %v389, 4294901760
        %391 = vmatpush1.xpose.msra.mxu0 %v390
        %392 = vmatprep.subr.mxu0 0.0
        %393 = vmatpush1.xpose.msra.mxu0 0.0
        %394 = vmatprep.subr.mxu0 0.0
        %395 = vmatpush1.xpose.msra.mxu0 0.0
        %396 = vmatprep.subr.mxu0 0.0
        %397 = vmatpush1.xpose.msra.mxu0 0.0
        %398 = vmatprep.subr.mxu0 0.0
        %399 = vmatpush1.xpose.msra.mxu0 0.0
        %400 = vmatprep.subr.mxu0 0.0
        %401 = vmatpush1.xpose.msra.mxu0 0.0
        %402 = vmatprep.subr.mxu0 0.0
        %403 = vmatpush1.xpose.msra.mxu0 0.0
        %404 = vmatprep.subr.mxu0 0.0
        %405 = vmatpush1.xpose.msra.mxu0 0.0
        %406 = vmatprep.subr.mxu0 0.0
        %407 = vmatpush1.xpose.msra.mxu0 0.0
        %408 = vmatprep.subr.mxu0 0.0
        %409 = vmatpush1.xpose.msra.mxu0 0.0
        %410 = vmatprep.subr.mxu0 0.0
        %411 = vmatpush1.xpose.msra.mxu0 0.0
        %412 = vmatprep.subr.mxu0 0.0
        %413 = vmatpush1.xpose.msra.mxu0 0.0
        %414 = vmatprep.subr.mxu0 0.0
        %415 = vmatpush1.xpose.msra.mxu0 0.0
        %416 = vmatprep.subr.mxu0 0.0
        %417 = vmatpush1.xpose.msra.mxu0 0.0
        %418 = vmatprep.subr.mxu0 0.0
        %419 = vmatpush1.xpose.msra.mxu0 0.0
        %420 = vmatprep.subr.mxu0 0.0
        %421 = vmatpush1.xpose.msra.mxu0 0.0
        %422 = vmatprep.subr.mxu0 0.0
        %423 = vmatpush1.xpose.msra.mxu0 0.0
        %424 = vmatprep.subr.mxu0 0.0
        %425 = vmatpush1.xpose.msra.mxu0 0.0
        %426 = vmatprep.subr.mxu0 0.0
        %427 = vmatpush1.xpose.msra.mxu0 0.0
        %428 = vmatprep.subr.mxu0 0.0
        %429 = vmatpush1.xpose.msra.mxu0 0.0
        %430 = vmatprep.subr.mxu0 0.0
        %431 = vmatpush1.xpose.msra.mxu0 0.0
        %432 = vmatprep.subr.mxu0 0.0
        %433 = vmatpush1.xpose.msra.mxu0 0.0
        %434 = vmatprep.subr.mxu0 0.0
        %435 = vmatpush1.xpose.msra.mxu0 0.0
        %436 = vmatprep.subr.mxu0 0.0
        %437 = vmatpush1.xpose.msra.mxu0 0.0
        %438 = vmatprep.subr.mxu0 0.0
        %439 = vmatpush1.xpose.msra.mxu0 0.0
        %440 = vmatprep.subr.mxu0 0.0
        %441 = vmatpush1.xpose.msra.mxu0 0.0
        %442 = vmatprep.subr.mxu0 0.0
        %443 = vmatpush1.xpose.msra.mxu0 0.0
        %444 = vmatprep.subr.mxu0 0.0
        %445 = vmatpush1.xpose.msra.mxu0 0.0
        %446 = vmatprep.subr.mxu0 0.0
        %447 = vmatpush1.xpose.msra.mxu0 0.0
        %448 = vmatprep.subr.mxu0 0.0
        %449 = vmatpush1.xpose.msra.mxu0 0.0
        %450 = vmatprep.subr.mxu0 0.0
        %451 = vmatpush1.xpose.msra.mxu0 0.0
        %452 = vmatprep.subr.mxu0 0.0
        %453 = vmatpush1.xpose.msra.mxu0 0.0
        %454 = vmatprep.mubr.f32.mxu0 0.0
        %v455 = vand.u32 %v305, 4294901760
        %456 = vmatmul.mubr.f32.gmra.mrb[0].mxu0 %v455
        %v457 = vpop.f32.mrb[0].mxu0
        %v458 = vadd.f32 %v382, %v457
        %v459 = vpop.f32.mrb[0].mxu0
        %460 = vdwg.mxu0
        %461 = vmatprep.subr.mxu0 0.0
        %v462 = vand.u32 %v307, 4294901760
        %v463 = vsub.f32 %v307, %v462
        %464 = vmatpush1.xpose.msra.mxu0 %v463
        %465 = vmatprep.subr.mxu0 0.0
        %466 = vmatpush1.xpose.msra.mxu0 0.0
        %467 = vmatprep.subr.mxu0 0.0
        %468 = vmatpush1.xpose.msra.mxu0 0.0
        %469 = vmatprep.subr.mxu0 0.0
        %470 = vmatpush1.xpose.msra.mxu0 0.0
        %471 = vmatprep.subr.mxu0 0.0
        %472 = vmatpush1.xpose.msra.mxu0 0.0
        %473 = vmatprep.subr.mxu0 0.0
        %474 = vmatpush1.xpose.msra.mxu0 0.0
        %475 = vmatprep.subr.mxu0 0.0
        %476 = vmatpush1.xpose.msra.mxu0 0.0
        %477 = vmatprep.subr.mxu0 0.0
        %478 = vmatpush1.xpose.msra.mxu0 0.0
        %479 = vmatprep.subr.mxu0 0.0
        %480 = vmatpush1.xpose.msra.mxu0 0.0
        %481 = vmatprep.subr.mxu0 0.0
        %482 = vmatpush1.xpose.msra.mxu0 0.0
        %483 = vmatprep.subr.mxu0 0.0
        %484 = vmatpush1.xpose.msra.mxu0 0.0
        %485 = vmatprep.subr.mxu0 0.0
        %486 = vmatpush1.xpose.msra.mxu0 0.0
        %487 = vmatprep.subr.mxu0 0.0
        %488 = vmatpush1.xpose.msra.mxu0 0.0
        %489 = vmatprep.subr.mxu0 0.0
        %490 = vmatpush1.xpose.msra.mxu0 0.0
        %491 = vmatprep.subr.mxu0 0.0
        %492 = vmatpush1.xpose.msra.mxu0 0.0
        %493 = vmatprep.subr.mxu0 0.0
        %494 = vmatpush1.xpose.msra.mxu0 0.0
        %495 = vmatprep.subr.mxu0 0.0
        %496 = vmatpush1.xpose.msra.mxu0 0.0
        %497 = vmatprep.subr.mxu0 0.0
        %498 = vmatpush1.xpose.msra.mxu0 0.0
        %499 = vmatprep.subr.mxu0 0.0
        %500 = vmatpush1.xpose.msra.mxu0 0.0
        %501 = vmatprep.subr.mxu0 0.0
        %502 = vmatpush1.xpose.msra.mxu0 0.0
        %503 = vmatprep.subr.mxu0 0.0
        %504 = vmatpush1.xpose.msra.mxu0 0.0
        %505 = vmatprep.subr.mxu0 0.0
        %506 = vmatpush1.xpose.msra.mxu0 0.0
        %507 = vmatprep.subr.mxu0 0.0
        %508 = vmatpush1.xpose.msra.mxu0 0.0
        %509 = vmatprep.subr.mxu0 0.0
        %510 = vmatpush1.xpose.msra.mxu0 0.0
        %511 = vmatprep.subr.mxu0 0.0
        %512 = vmatpush1.xpose.msra.mxu0 0.0
        %513 = vmatprep.subr.mxu0 0.0
        %514 = vmatpush1.xpose.msra.mxu0 0.0
        %515 = vmatprep.subr.mxu0 0.0
        %516 = vmatpush1.xpose.msra.mxu0 0.0
        %517 = vmatprep.subr.mxu0 0.0
        %518 = vmatpush1.xpose.msra.mxu0 0.0
        %519 = vmatprep.subr.mxu0 0.0
        %520 = vmatpush1.xpose.msra.mxu0 0.0
        %521 = vmatprep.subr.mxu0 0.0
        %522 = vmatpush1.xpose.msra.mxu0 0.0
        %523 = vmatprep.subr.mxu0 0.0
        %524 = vmatpush1.xpose.msra.mxu0 0.0
        %525 = vmatprep.subr.mxu0 0.0
        %526 = vmatpush1.xpose.msra.mxu0 0.0
        %527 = vmatprep.mubr.f32.mxu0 0.0
        %v528 = vand.u32 %v305, 4294901760
        %v529 = vsub.f32 %v305, %v528
        %530 = vmatmul.mubr.f32.gmra.mrb[0].mxu0 %v529
        %v531 = vpop.f32.mrb[0].mxu0
        %v532 = vadd.f32 %v458, %v531
        %v533 = vpop.f32.mrb[0].mxu0
        %534 = vdwg.mxu0
        %535 = vmatprep.subr.mxu0 0.0
        %v536 = vand.u32 %v307, 4294901760
        %537 = vmatpush1.xpose.msra.mxu0 %v536
        %538 = vmatprep.subr.mxu0 0.0
        %539 = vmatpush1.xpose.msra.mxu0 0.0
        %540 = vmatprep.subr.mxu0 0.0
        %541 = vmatpush1.xpose.msra.mxu0 0.0
        %542 = vmatprep.subr.mxu0 0.0
        %543 = vmatpush1.xpose.msra.mxu0 0.0
        %544 = vmatprep.subr.mxu0 0.0
        %545 = vmatpush1.xpose.msra.mxu0 0.0
        %546 = vmatprep.subr.mxu0 0.0
        %547 = vmatpush1.xpose.msra.mxu0 0.0
        %548 = vmatprep.subr.mxu0 0.0
        %549 = vmatpush1.xpose.msra.mxu0 0.0
        %550 = vmatprep.subr.mxu0 0.0
        %551 = vmatpush1.xpose.msra.mxu0 0.0
        %552 = vmatprep.subr.mxu0 0.0
        %553 = vmatpush1.xpose.msra.mxu0 0.0
        %554 = vmatprep.subr.mxu0 0.0
        %555 = vmatpush1.xpose.msra.mxu0 0.0
        %556 = vmatprep.subr.mxu0 0.0
        %557 = vmatpush1.xpose.msra.mxu0 0.0
        %558 = vmatprep.subr.mxu0 0.0
        %559 = vmatpush1.xpose.msra.mxu0 0.0
        %560 = vmatprep.subr.mxu0 0.0
        %561 = vmatpush1.xpose.msra.mxu0 0.0
        %562 = vmatprep.subr.mxu0 0.0
        %563 = vmatpush1.xpose.msra.mxu0 0.0
        %564 = vmatprep.subr.mxu0 0.0
        %565 = vmatpush1.xpose.msra.mxu0 0.0
        %566 = vmatprep.subr.mxu0 0.0
        %567 = vmatpush1.xpose.msra.mxu0 0.0
        %568 = vmatprep.subr.mxu0 0.0
        %569 = vmatpush1.xpose.msra.mxu0 0.0
        %570 = vmatprep.subr.mxu0 0.0
        %571 = vmatpush1.xpose.msra.mxu0 0.0
        %572 = vmatprep.subr.mxu0 0.0
        %573 = vmatpush1.xpose.msra.mxu0 0.0
        %574 = vmatprep.subr.mxu0 0.0
        %575 = vmatpush1.xpose.msra.mxu0 0.0
        %576 = vmatprep.subr.mxu0 0.0
        %577 = vmatpush1.xpose.msra.mxu0 0.0
        %578 = vmatprep.subr.mxu0 0.0
        %579 = vmatpush1.xpose.msra.mxu0 0.0
        %580 = vmatprep.subr.mxu0 0.0
        %581 = vmatpush1.xpose.msra.mxu0 0.0
        %582 = vmatprep.subr.mxu0 0.0
        %583 = vmatpush1.xpose.msra.mxu0 0.0
        %584 = vmatprep.subr.mxu0 0.0
        %585 = vmatpush1.xpose.msra.mxu0 0.0
        %586 = vmatprep.subr.mxu0 0.0
        %587 = vmatpush1.xpose.msra.mxu0 0.0
        %588 = vmatprep.subr.mxu0 0.0
        %589 = vmatpush1.xpose.msra.mxu0 0.0
        %590 = vmatprep.subr.mxu0 0.0
        %591 = vmatpush1.xpose.msra.mxu0 0.0
        %592 = vmatprep.subr.mxu0 0.0
        %593 = vmatpush1.xpose.msra.mxu0 0.0
        %594 = vmatprep.subr.mxu0 0.0
        %595 = vmatpush1.xpose.msra.mxu0 0.0
        %596 = vmatprep.subr.mxu0 0.0
        %597 = vmatpush1.xpose.msra.mxu0 0.0
        %598 = vmatprep.subr.mxu0 0.0
        %599 = vmatpush1.xpose.msra.mxu0 0.0
        %600 = vmatprep.mubr.f32.mxu0 0.0
        %v601 = vand.u32 %v305, 4294901760
        %v602 = vsub.f32 %v305, %v601
        %v603 = vand.u32 %v602, 4294901760
        %604 = vmatmul.mubr.f32.gmra.mrb[0].mxu0 %v603
        %v605 = vpop.f32.mrb[0].mxu0
        %v606 = vadd.f32 %v532, %v605
        %v607 = vpop.f32.mrb[0].mxu0
        %608 = vdwg.mxu0
        %609 = vmatprep.subr.mxu0 0.0
        %v610 = vand.u32 %v307, 4294901760
        %v611 = vsub.f32 %v307, %v610
        %v612 = vand.u32 %v611, 4294901760
        %613 = vmatpush1.xpose.msra.mxu0 %v612
        %614 = vmatprep.subr.mxu0 0.0
        %615 = vmatpush1.xpose.msra.mxu0 0.0
        %616 = vmatprep.subr.mxu0 0.0
        %617 = vmatpush1.xpose.msra.mxu0 0.0
        %618 = vmatprep.subr.mxu0 0.0
        %619 = vmatpush1.xpose.msra.mxu0 0.0
        %620 = vmatprep.subr.mxu0 0.0
        %621 = vmatpush1.xpose.msra.mxu0 0.0
        %622 = vmatprep.subr.mxu0 0.0
        %623 = vmatpush1.xpose.msra.mxu0 0.0
        %624 = vmatprep.subr.mxu0 0.0
        %625 = vmatpush1.xpose.msra.mxu0 0.0
        %626 = vmatprep.subr.mxu0 0.0
        %627 = vmatpush1.xpose.msra.mxu0 0.0
        %628 = vmatprep.subr.mxu0 0.0
        %629 = vmatpush1.xpose.msra.mxu0 0.0
        %630 = vmatprep.subr.mxu0 0.0
        %631 = vmatpush1.xpose.msra.mxu0 0.0
        %632 = vmatprep.subr.mxu0 0.0
        %633 = vmatpush1.xpose.msra.mxu0 0.0
        %634 = vmatprep.subr.mxu0 0.0
        %635 = vmatpush1.xpose.msra.mxu0 0.0
        %636 = vmatprep.subr.mxu0 0.0
        %637 = vmatpush1.xpose.msra.mxu0 0.0
        %638 = vmatprep.subr.mxu0 0.0
        %639 = vmatpush1.xpose.msra.mxu0 0.0
        %640 = vmatprep.subr.mxu0 0.0
        %641 = vmatpush1.xpose.msra.mxu0 0.0
        %642 = vmatprep.subr.mxu0 0.0
        %643 = vmatpush1.xpose.msra.mxu0 0.0
        %644 = vmatprep.subr.mxu0 0.0
        %645 = vmatpush1.xpose.msra.mxu0 0.0
        %646 = vmatprep.subr.mxu0 0.0
        %647 = vmatpush1.xpose.msra.mxu0 0.0
        %648 = vmatprep.subr.mxu0 0.0
        %649 = vmatpush1.xpose.msra.mxu0 0.0
        %650 = vmatprep.subr.mxu0 0.0
        %651 = vmatpush1.xpose.msra.mxu0 0.0
        %652 = vmatprep.subr.mxu0 0.0
        %653 = vmatpush1.xpose.msra.mxu0 0.0
        %654 = vmatprep.subr.mxu0 0.0
        %655 = vmatpush1.xpose.msra.mxu0 0.0
        %656 = vmatprep.subr.mxu0 0.0
        %657 = vmatpush1.xpose.msra.mxu0 0.0
        %658 = vmatprep.subr.mxu0 0.0
        %659 = vmatpush1.xpose.msra.mxu0 0.0
        %660 = vmatprep.subr.mxu0 0.0
        %661 = vmatpush1.xpose.msra.mxu0 0.0
        %662 = vmatprep.subr.mxu0 0.0
        %663 = vmatpush1.xpose.msra.mxu0 0.0
        %664 = vmatprep.subr.mxu0 0.0
        %665 = vmatpush1.xpose.msra.mxu0 0.0
        %666 = vmatprep.subr.mxu0 0.0
        %667 = vmatpush1.xpose.msra.mxu0 0.0
        %668 = vmatprep.subr.mxu0 0.0
        %669 = vmatpush1.xpose.msra.mxu0 0.0
        %670 = vmatprep.subr.mxu0 0.0
        %671 = vmatpush1.xpose.msra.mxu0 0.0
        %672 = vmatprep.subr.mxu0 0.0
        %673 = vmatpush1.xpose.msra.mxu0 0.0
        %674 = vmatprep.subr.mxu0 0.0
        %675 = vmatpush1.xpose.msra.mxu0 0.0
        %676 = vmatprep.mubr.f32.mxu0 0.0
        %v677 = vand.u32 %v305, 4294901760
        %678 = vmatmul.mubr.f32.gmra.mrb[0].mxu0 %v677
        %v679 = vpop.f32.mrb[0].mxu0
        %v680 = vadd.f32 %v606, %v679
        %v681 = vpop.f32.mrb[0].mxu0
        %682 = vdwg.mxu0
        %683 = vmatprep.subr.mxu0 0.0
        %v684 = vand.u32 %v307, 4294901760
        %685 = vmatpush1.xpose.msra.mxu0 %v684
        %686 = vmatprep.subr.mxu0 0.0
        %687 = vmatpush1.xpose.msra.mxu0 0.0
        %688 = vmatprep.subr.mxu0 0.0
        %689 = vmatpush1.xpose.msra.mxu0 0.0
        %690 = vmatprep.subr.mxu0 0.0
        %691 = vmatpush1.xpose.msra.mxu0 0.0
        %692 = vmatprep.subr.mxu0 0.0
        %693 = vmatpush1.xpose.msra.mxu0 0.0
        %694 = vmatprep.subr.mxu0 0.0
        %695 = vmatpush1.xpose.msra.mxu0 0.0
        %696 = vmatprep.subr.mxu0 0.0
        %697 = vmatpush1.xpose.msra.mxu0 0.0
        %698 = vmatprep.subr.mxu0 0.0
        %699 = vmatpush1.xpose.msra.mxu0 0.0
        %700 = vmatprep.subr.mxu0 0.0
        %701 = vmatpush1.xpose.msra.mxu0 0.0
        %702 = vmatprep.subr.mxu0 0.0
        %703 = vmatpush1.xpose.msra.mxu0 0.0
        %704 = vmatprep.subr.mxu0 0.0
        %705 = vmatpush1.xpose.msra.mxu0 0.0
        %706 = vmatprep.subr.mxu0 0.0
        %707 = vmatpush1.xpose.msra.mxu0 0.0
        %708 = vmatprep.subr.mxu0 0.0
        %709 = vmatpush1.xpose.msra.mxu0 0.0
        %710 = vmatprep.subr.mxu0 0.0
        %711 = vmatpush1.xpose.msra.mxu0 0.0
        %712 = vmatprep.subr.mxu0 0.0
        %713 = vmatpush1.xpose.msra.mxu0 0.0
        %714 = vmatprep.subr.mxu0 0.0
        %715 = vmatpush1.xpose.msra.mxu0 0.0
        %716 = vmatprep.subr.mxu0 0.0
        %717 = vmatpush1.xpose.msra.mxu0 0.0
        %718 = vmatprep.subr.mxu0 0.0
        %719 = vmatpush1.xpose.msra.mxu0 0.0
        %720 = vmatprep.subr.mxu0 0.0
        %721 = vmatpush1.xpose.msra.mxu0 0.0
        %722 = vmatprep.subr.mxu0 0.0
        %723 = vmatpush1.xpose.msra.mxu0 0.0
        %724 = vmatprep.subr.mxu0 0.0
        %725 = vmatpush1.xpose.msra.mxu0 0.0
        %726 = vmatprep.subr.mxu0 0.0
        %727 = vmatpush1.xpose.msra.mxu0 0.0
        %728 = vmatprep.subr.mxu0 0.0
        %729 = vmatpush1.xpose.msra.mxu0 0.0
        %730 = vmatprep.subr.mxu0 0.0
        %731 = vmatpush1.xpose.msra.mxu0 0.0
        %732 = vmatprep.subr.mxu0 0.0
        %733 = vmatpush1.xpose.msra.mxu0 0.0
        %734 = vmatprep.subr.mxu0 0.0
        %735 = vmatpush1.xpose.msra.mxu0 0.0
        %736 = vmatprep.subr.mxu0 0.0
        %737 = vmatpush1.xpose.msra.mxu0 0.0
        %738 = vmatprep.subr.mxu0 0.0
        %739 = vmatpush1.xpose.msra.mxu0 0.0
        %740 = vmatprep.subr.mxu0 0.0
        %741 = vmatpush1.xpose.msra.mxu0 0.0
        %742 = vmatprep.subr.mxu0 0.0
        %743 = vmatpush1.xpose.msra.mxu0 0.0
        %744 = vmatprep.subr.mxu0 0.0
        %745 = vmatpush1.xpose.msra.mxu0 0.0
        %746 = vmatprep.subr.mxu0 0.0
        %747 = vmatpush1.xpose.msra.mxu0 0.0
        %748 = vmatprep.mubr.f32.mxu0 0.0
        %v749 = vand.u32 %v305, 4294901760
        %750 = vmatmul.mubr.f32.gmra.mrb[0].mxu0 %v749
        %v751 = vpop.f32.mrb[0].mxu0
        %v752 = vadd.f32 %v680, %v751
        %v753 = vpop.f32.mrb[0].mxu0
        %754 = vdwg.mxu0
        %v755 = vsel %vm297, 16843009, 0
        %v756 = vunpack.c.0.s8 %v755
        %vm757 = vcmp.ne.s32.totalorder %v756, 0
        %v758 = vsel %vm757, %v752, -1e+30
        %v759 = vld [vmem:[#allocation3] sm:$0xff]
        %vm760 = vcmask 64512
        %v761 = vsel %vm760, %v758, -inf
        %762 = vmax.xlane.f32.xlu0 %v761
        %v763 = vpop.xlane.xlu0 %762
        %v764 = vmax.f32 %v759, %v763
        %v765 = vsub.f32 %v759, %v764
        %v766 = vpow.pop %v765
        %768 = vset.pattern.permute.xlu0 0
        %769 = vperm.xlu0 %768, %v764
        %v770 = vpop.permute.xlu0 %769
        %v772 = vsub.f32 %v758, %v770
        %v773 = vpow.pop %v772
        %v774 = vld [vmem:[#allocation4] sm:$0xff]
        %v775 = vmul.f32 %v766, %v774
        %v776 = vsel %vm760, %v773, 0.0
        %777 = vadd.xlane.f32.xlu0 %v776
        %v778 = vpop.xlane.xlu0 %777
        %v779 = vadd.f32 %v775, %v778
        %vm780 = vcmask 7168
        %781 = vst.msk [vmem:[#allocation4] sm:$0xff] %vm780, %v779
        %782 = vrot.lane.b32.xlu0 %v299, 64
        %v783 = vpop.permute.xlu0 %782
        %v786 = vsel %vm760, %v773, 0
        %788 = vmatprep.subr.mxu0 0.0
        %v789 = vand.u32 %v783, 4294901760
        %790 = vmatpush1.msra.mxu0 %v789
        %791 = vmatprep.subr.mxu0 0.0
        %792 = vmatpush1.msra.mxu0 0.0
        %793 = vmatprep.subr.mxu0 0.0
        %794 = vmatpush1.msra.mxu0 0.0
        %795 = vmatprep.subr.mxu0 0.0
        %796 = vmatpush1.msra.mxu0 0.0
        %797 = vmatprep.subr.mxu0 0.0
        %798 = vmatpush1.msra.mxu0 0.0
        %799 = vmatprep.subr.mxu0 0.0
        %800 = vmatpush1.msra.mxu0 0.0
        %801 = vmatprep.subr.mxu0 0.0
        %802 = vmatpush1.msra.mxu0 0.0
        %803 = vmatprep.subr.mxu0 0.0
        %804 = vmatpush1.msra.mxu0 0.0
        %805 = vmatprep.subr.mxu0 0.0
        %806 = vmatpush1.msra.mxu0 0.0
        %807 = vmatprep.subr.mxu0 0.0
        %808 = vmatpush1.msra.mxu0 0.0
        %809 = vmatprep.subr.mxu0 0.0
        %810 = vmatpush1.msra.mxu0 0.0
        %811 = vmatprep.subr.mxu0 0.0
        %812 = vmatpush1.msra.mxu0 0.0
        %813 = vmatprep.subr.mxu0 0.0
        %814 = vmatpush1.msra.mxu0 0.0
        %815 = vmatprep.subr.mxu0 0.0
        %816 = vmatpush1.msra.mxu0 0.0
        %817 = vmatprep.subr.mxu0 0.0
        %818 = vmatpush1.msra.mxu0 0.0
        %819 = vmatprep.subr.mxu0 0.0
        %820 = vmatpush1.msra.mxu0 0.0
        %821 = vmatprep.subr.mxu0 0.0
        %822 = vmatpush1.msra.mxu0 0.0
        %823 = vmatprep.subr.mxu0 0.0
        %824 = vmatpush1.msra.mxu0 0.0
        %825 = vmatprep.subr.mxu0 0.0
        %826 = vmatpush1.msra.mxu0 0.0
        %827 = vmatprep.subr.mxu0 0.0
        %828 = vmatpush1.msra.mxu0 0.0
        %829 = vmatprep.subr.mxu0 0.0
        %830 = vmatpush1.msra.mxu0 0.0
        %831 = vmatprep.subr.mxu0 0.0
        %832 = vmatpush1.msra.mxu0 0.0
        %833 = vmatprep.subr.mxu0 0.0
        %834 = vmatpush1.msra.mxu0 0.0
        %835 = vmatprep.subr.mxu0 0.0
        %836 = vmatpush1.msra.mxu0 0.0
        %837 = vmatprep.subr.mxu0 0.0
        %838 = vmatpush1.msra.mxu0 0.0
        %839 = vmatprep.subr.mxu0 0.0
        %840 = vmatpush1.msra.mxu0 0.0
        %841 = vmatprep.subr.mxu0 0.0
        %842 = vmatpush1.msra.mxu0 0.0
        %843 = vmatprep.subr.mxu0 0.0
        %844 = vmatpush1.msra.mxu0 0.0
        %845 = vmatprep.subr.mxu0 0.0
        %846 = vmatpush1.msra.mxu0 0.0
        %847 = vmatprep.subr.mxu0 0.0
        %848 = vmatpush1.msra.mxu0 0.0
        %849 = vmatprep.subr.mxu0 0.0
        %850 = vmatpush1.msra.mxu0 0.0
        %851 = vmatprep.subr.mxu0 0.0
        %852 = vmatpush1.msra.mxu0 0.0
        %853 = vmatprep.mubr.f32.mxu0 0.0
        %v854 = vand.u32 %v786, 4294901760
        %v855 = vsub.f32 %v786, %v854
        %v856 = vand.u32 %v855, 4294901760
        %v857 = vsub.f32 %v855, %v856
        %v858 = vand.u32 %v857, 4294901760
        %859 = vmatmul.mubr.f32.gmra.mrb[0].mxu0 %v858
        %v860 = vpop.f32.mrb[0].mxu0
        %v861 = vadd.f32 0.0, %v860
        %v862 = vpop.f32.mrb[0].mxu0
        %863 = vdwg.mxu0
        %864 = vmatprep.subr.mxu0 0.0
        %v865 = vand.u32 %v783, 4294901760
        %v866 = vsub.f32 %v783, %v865
        %v867 = vand.u32 %v866, 4294901760
        %v868 = vsub.f32 %v866, %v867
        %v869 = vand.u32 %v868, 4294901760
        %870 = vmatpush1.msra.mxu0 %v869
        %871 = vmatprep.subr.mxu0 0.0
        %872 = vmatpush1.msra.mxu0 0.0
        %873 = vmatprep.subr.mxu0 0.0
        %874 = vmatpush1.msra.mxu0 0.0
        %875 = vmatprep.subr.mxu0 0.0
        %876 = vmatpush1.msra.mxu0 0.0
        %877 = vmatprep.subr.mxu0 0.0
        %878 = vmatpush1.msra.mxu0 0.0
        %879 = vmatprep.subr.mxu0 0.0
        %880 = vmatpush1.msra.mxu0 0.0
        %881 = vmatprep.subr.mxu0 0.0
        %882 = vmatpush1.msra.mxu0 0.0
        %883 = vmatprep.subr.mxu0 0.0
        %884 = vmatpush1.msra.mxu0 0.0
        %885 = vmatprep.subr.mxu0 0.0
        %886 = vmatpush1.msra.mxu0 0.0
        %887 = vmatprep.subr.mxu0 0.0
        %888 = vmatpush1.msra.mxu0 0.0
        %889 = vmatprep.subr.mxu0 0.0
        %890 = vmatpush1.msra.mxu0 0.0
        %891 = vmatprep.subr.mxu0 0.0
        %892 = vmatpush1.msra.mxu0 0.0
        %893 = vmatprep.subr.mxu0 0.0
        %894 = vmatpush1.msra.mxu0 0.0
        %895 = vmatprep.subr.mxu0 0.0
        %896 = vmatpush1.msra.mxu0 0.0
        %897 = vmatprep.subr.mxu0 0.0
        %898 = vmatpush1.msra.mxu0 0.0
        %899 = vmatprep.subr.mxu0 0.0
        %900 = vmatpush1.msra.mxu0 0.0
        %901 = vmatprep.subr.mxu0 0.0
        %902 = vmatpush1.msra.mxu0 0.0
        %903 = vmatprep.subr.mxu0 0.0
        %904 = vmatpush1.msra.mxu0 0.0
        %905 = vmatprep.subr.mxu0 0.0
        %906 = vmatpush1.msra.mxu0 0.0
        %907 = vmatprep.subr.mxu0 0.0
        %908 = vmatpush1.msra.mxu0 0.0
        %909 = vmatprep.subr.mxu0 0.0
        %910 = vmatpush1.msra.mxu0 0.0
        %911 = vmatprep.subr.mxu0 0.0
        %912 = vmatpush1.msra.mxu0 0.0
        %913 = vmatprep.subr.mxu0 0.0
        %914 = vmatpush1.msra.mxu0 0.0
        %915 = vmatprep.subr.mxu0 0.0
        %916 = vmatpush1.msra.mxu0 0.0
        %917 = vmatprep.subr.mxu0 0.0
        %918 = vmatpush1.msra.mxu0 0.0
        %919 = vmatprep.subr.mxu0 0.0
        %920 = vmatpush1.msra.mxu0 0.0
        %921 = vmatprep.subr.mxu0 0.0
        %922 = vmatpush1.msra.mxu0 0.0
        %923 = vmatprep.subr.mxu0 0.0
        %924 = vmatpush1.msra.mxu0 0.0
        %925 = vmatprep.subr.mxu0 0.0
        %926 = vmatpush1.msra.mxu0 0.0
        %927 = vmatprep.subr.mxu0 0.0
        %928 = vmatpush1.msra.mxu0 0.0
        %929 = vmatprep.subr.mxu0 0.0
        %930 = vmatpush1.msra.mxu0 0.0
        %931 = vmatprep.subr.mxu0 0.0
        %932 = vmatpush1.msra.mxu0 0.0
        %933 = vmatprep.mubr.f32.mxu0 0.0
        %v934 = vand.u32 %v786, 4294901760
        %935 = vmatmul.mubr.f32.gmra.mrb[0].mxu0 %v934
        %v936 = vpop.f32.mrb[0].mxu0
        %v937 = vadd.f32 %v861, %v936
        %v938 = vpop.f32.mrb[0].mxu0
        %939 = vdwg.mxu0
        %940 = vmatprep.subr.mxu0 0.0
        %v941 = vand.u32 %v783, 4294901760
        %v942 = vsub.f32 %v783, %v941
        %943 = vmatpush1.msra.mxu0 %v942
        %944 = vmatprep.subr.mxu0 0.0
        %945 = vmatpush1.msra.mxu0 0.0
        %946 = vmatprep.subr.mxu0 0.0
        %947 = vmatpush1.msra.mxu0 0.0
        %948 = vmatprep.subr.mxu0 0.0
        %949 = vmatpush1.msra.mxu0 0.0
        %950 = vmatprep.subr.mxu0 0.0
        %951 = vmatpush1.msra.mxu0 0.0
        %952 = vmatprep.subr.mxu0 0.0
        %953 = vmatpush1.msra.mxu0 0.0
        %954 = vmatprep.subr.mxu0 0.0
        %955 = vmatpush1.msra.mxu0 0.0
        %956 = vmatprep.subr.mxu0 0.0
        %957 = vmatpush1.msra.mxu0 0.0
        %958 = vmatprep.subr.mxu0 0.0
        %959 = vmatpush1.msra.mxu0 0.0
        %960 = vmatprep.subr.mxu0 0.0
        %961 = vmatpush1.msra.mxu0 0.0
        %962 = vmatprep.subr.mxu0 0.0
        %963 = vmatpush1.msra.mxu0 0.0
        %964 = vmatprep.subr.mxu0 0.0
        %965 = vmatpush1.msra.mxu0 0.0
        %966 = vmatprep.subr.mxu0 0.0
        %967 = vmatpush1.msra.mxu0 0.0
        %968 = vmatprep.subr.mxu0 0.0
        %969 = vmatpush1.msra.mxu0 0.0
        %970 = vmatprep.subr.mxu0 0.0
        %971 = vmatpush1.msra.mxu0 0.0
        %972 = vmatprep.subr.mxu0 0.0
        %973 = vmatpush1.msra.mxu0 0.0
        %974 = vmatprep.subr.mxu0 0.0
        %975 = vmatpush1.msra.mxu0 0.0
        %976 = vmatprep.subr.mxu0 0.0
        %977 = vmatpush1.msra.mxu0 0.0
        %978 = vmatprep.subr.mxu0 0.0
        %979 = vmatpush1.msra.mxu0 0.0
        %980 = vmatprep.subr.mxu0 0.0
        %981 = vmatpush1.msra.mxu0 0.0
        %982 = vmatprep.subr.mxu0 0.0
        %983 = vmatpush1.msra.mxu0 0.0
        %984 = vmatprep.subr.mxu0 0.0
        %985 = vmatpush1.msra.mxu0 0.0
        %986 = vmatprep.subr.mxu0 0.0
        %987 = vmatpush1.msra.mxu0 0.0
        %988 = vmatprep.subr.mxu0 0.0
        %989 = vmatpush1.msra.mxu0 0.0
        %990 = vmatprep.subr.mxu0 0.0
        %991 = vmatpush1.msra.mxu0 0.0
        %992 = vmatprep.subr.mxu0 0.0
        %993 = vmatpush1.msra.mxu0 0.0
        %994 = vmatprep.subr.mxu0 0.0
        %995 = vmatpush1.msra.mxu0 0.0
        %996 = vmatprep.subr.mxu0 0.0
        %997 = vmatpush1.msra.mxu0 0.0
        %998 = vmatprep.subr.mxu0 0.0
        %999 = vmatpush1.msra.mxu0 0.0
        %1000 = vmatprep.subr.mxu0 0.0
        %1001 = vmatpush1.msra.mxu0 0.0
        %1002 = vmatprep.subr.mxu0 0.0
        %1003 = vmatpush1.msra.mxu0 0.0
        %1004 = vmatprep.subr.mxu0 0.0
        %1005 = vmatpush1.msra.mxu0 0.0
        %1006 = vmatprep.mubr.f32.mxu0 0.0
        %v1007 = vand.u32 %v786, 4294901760
        %v1008 = vsub.f32 %v786, %v1007
        %1009 = vmatmul.mubr.f32.gmra.mrb[0].mxu0 %v1008
        %v1010 = vpop.f32.mrb[0].mxu0
        %v1011 = vadd.f32 %v937, %v1010
        %v1012 = vpop.f32.mrb[0].mxu0
        %1013 = vdwg.mxu0
        %1014 = vmatprep.subr.mxu0 0.0
        %v1015 = vand.u32 %v783, 4294901760
        %1016 = vmatpush1.msra.mxu0 %v1015
        %1017 = vmatprep.subr.mxu0 0.0
        %1018 = vmatpush1.msra.mxu0 0.0
        %1019 = vmatprep.subr.mxu0 0.0
        %1020 = vmatpush1.msra.mxu0 0.0
        %1021 = vmatprep.subr.mxu0 0.0
        %1022 = vmatpush1.msra.mxu0 0.0
        %1023 = vmatprep.subr.mxu0 0.0
        %1024 = vmatpush1.msra.mxu0 0.0
        %1025 = vmatprep.subr.mxu0 0.0
        %1026 = vmatpush1.msra.mxu0 0.0
        %1027 = vmatprep.subr.mxu0 0.0
        %1028 = vmatpush1.msra.mxu0 0.0
        %1029 = vmatprep.subr.mxu0 0.0
        %1030 = vmatpush1.msra.mxu0 0.0
        %1031 = vmatprep.subr.mxu0 0.0
        %1032 = vmatpush1.msra.mxu0 0.0
        %1033 = vmatprep.subr.mxu0 0.0
        %1034 = vmatpush1.msra.mxu0 0.0
        %1035 = vmatprep.subr.mxu0 0.0
        %1036 = vmatpush1.msra.mxu0 0.0
        %1037 = vmatprep.subr.mxu0 0.0
        %1038 = vmatpush1.msra.mxu0 0.0
        %1039 = vmatprep.subr.mxu0 0.0
        %1040 = vmatpush1.msra.mxu0 0.0
        %1041 = vmatprep.subr.mxu0 0.0
        %1042 = vmatpush1.msra.mxu0 0.0
        %1043 = vmatprep.subr.mxu0 0.0
        %1044 = vmatpush1.msra.mxu0 0.0
        %1045 = vmatprep.subr.mxu0 0.0
        %1046 = vmatpush1.msra.mxu0 0.0
        %1047 = vmatprep.subr.mxu0 0.0
        %1048 = vmatpush1.msra.mxu0 0.0
        %1049 = vmatprep.subr.mxu0 0.0
        %1050 = vmatpush1.msra.mxu0 0.0
        %1051 = vmatprep.subr.mxu0 0.0
        %1052 = vmatpush1.msra.mxu0 0.0
        %1053 = vmatprep.subr.mxu0 0.0
        %1054 = vmatpush1.msra.mxu0 0.0
        %1055 = vmatprep.subr.mxu0 0.0
        %1056 = vmatpush1.msra.mxu0 0.0
        %1057 = vmatprep.subr.mxu0 0.0
        %1058 = vmatpush1.msra.mxu0 0.0
        %1059 = vmatprep.subr.mxu0 0.0
        %1060 = vmatpush1.msra.mxu0 0.0
        %1061 = vmatprep.subr.mxu0 0.0
        %1062 = vmatpush1.msra.mxu0 0.0
        %1063 = vmatprep.subr.mxu0 0.0
        %1064 = vmatpush1.msra.mxu0 0.0
        %1065 = vmatprep.subr.mxu0 0.0
        %1066 = vmatpush1.msra.mxu0 0.0
        %1067 = vmatprep.subr.mxu0 0.0
        %1068 = vmatpush1.msra.mxu0 0.0
        %1069 = vmatprep.subr.mxu0 0.0
        %1070 = vmatpush1.msra.mxu0 0.0
        %1071 = vmatprep.subr.mxu0 0.0
        %1072 = vmatpush1.msra.mxu0 0.0
        %1073 = vmatprep.subr.mxu0 0.0
        %1074 = vmatpush1.msra.mxu0 0.0
        %1075 = vmatprep.subr.mxu0 0.0
        %1076 = vmatpush1.msra.mxu0 0.0
        %1077 = vmatprep.subr.mxu0 0.0
        %1078 = vmatpush1.msra.mxu0 0.0
        %1079 = vmatprep.mubr.f32.mxu0 0.0
        %v1080 = vand.u32 %v786, 4294901760
        %v1081 = vsub.f32 %v786, %v1080
        %v1082 = vand.u32 %v1081, 4294901760
        %1083 = vmatmul.mubr.f32.gmra.mrb[0].mxu0 %v1082
        %v1084 = vpop.f32.mrb[0].mxu0
        %v1085 = vadd.f32 %v1011, %v1084
        %v1086 = vpop.f32.mrb[0].mxu0
        %1087 = vdwg.mxu0
        %1088 = vmatprep.subr.mxu0 0.0
        %v1089 = vand.u32 %v783, 4294901760
        %v1090 = vsub.f32 %v783, %v1089
        %v1091 = vand.u32 %v1090, 4294901760
        %1092 = vmatpush1.msra.mxu0 %v1091
        %1093 = vmatprep.subr.mxu0 0.0
        %1094 = vmatpush1.msra.mxu0 0.0
        %1095 = vmatprep.subr.mxu0 0.0
        %1096 = vmatpush1.msra.mxu0 0.0
        %1097 = vmatprep.subr.mxu0 0.0
        %1098 = vmatpush1.msra.mxu0 0.0
        %1099 = vmatprep.subr.mxu0 0.0
        %1100 = vmatpush1.msra.mxu0 0.0
        %1101 = vmatprep.subr.mxu0 0.0
        %1102 = vmatpush1.msra.mxu0 0.0
        %1103 = vmatprep.subr.mxu0 0.0
        %1104 = vmatpush1.msra.mxu0 0.0
        %1105 = vmatprep.subr.mxu0 0.0
        %1106 = vmatpush1.msra.mxu0 0.0
        %1107 = vmatprep.subr.mxu0 0.0
        %1108 = vmatpush1.msra.mxu0 0.0
        %1109 = vmatprep.subr.mxu0 0.0
        %1110 = vmatpush1.msra.mxu0 0.0
        %1111 = vmatprep.subr.mxu0 0.0
        %1112 = vmatpush1.msra.mxu0 0.0
        %1113 = vmatprep.subr.mxu0 0.0
        %1114 = vmatpush1.msra.mxu0 0.0
        %1115 = vmatprep.subr.mxu0 0.0
        %1116 = vmatpush1.msra.mxu0 0.0
        %1117 = vmatprep.subr.mxu0 0.0
        %1118 = vmatpush1.msra.mxu0 0.0
        %1119 = vmatprep.subr.mxu0 0.0
        %1120 = vmatpush1.msra.mxu0 0.0
        %1121 = vmatprep.subr.mxu0 0.0
        %1122 = vmatpush1.msra.mxu0 0.0
        %1123 = vmatprep.subr.mxu0 0.0
        %1124 = vmatpush1.msra.mxu0 0.0
        %1125 = vmatprep.subr.mxu0 0.0
        %1126 = vmatpush1.msra.mxu0 0.0
        %1127 = vmatprep.subr.mxu0 0.0
        %1128 = vmatpush1.msra.mxu0 0.0
        %1129 = vmatprep.subr.mxu0 0.0
        %1130 = vmatpush1.msra.mxu0 0.0
        %1131 = vmatprep.subr.mxu0 0.0
        %1132 = vmatpush1.msra.mxu0 0.0
        %1133 = vmatprep.subr.mxu0 0.0
        %1134 = vmatpush1.msra.mxu0 0.0
        %1135 = vmatprep.subr.mxu0 0.0
        %1136 = vmatpush1.msra.mxu0 0.0
        %1137 = vmatprep.subr.mxu0 0.0
        %1138 = vmatpush1.msra.mxu0 0.0
        %1139 = vmatprep.subr.mxu0 0.0
        %1140 = vmatpush1.msra.mxu0 0.0
        %1141 = vmatprep.subr.mxu0 0.0
        %1142 = vmatpush1.msra.mxu0 0.0
        %1143 = vmatprep.subr.mxu0 0.0
        %1144 = vmatpush1.msra.mxu0 0.0
        %1145 = vmatprep.subr.mxu0 0.0
        %1146 = vmatpush1.msra.mxu0 0.0
        %1147 = vmatprep.subr.mxu0 0.0
        %1148 = vmatpush1.msra.mxu0 0.0
        %1149 = vmatprep.subr.mxu0 0.0
        %1150 = vmatpush1.msra.mxu0 0.0
        %1151 = vmatprep.subr.mxu0 0.0
        %1152 = vmatpush1.msra.mxu0 0.0
        %1153 = vmatprep.subr.mxu0 0.0
        %1154 = vmatpush1.msra.mxu0 0.0
        %1155 = vmatprep.mubr.f32.mxu0 0.0
        %v1156 = vand.u32 %v786, 4294901760
        %1157 = vmatmul.mubr.f32.gmra.mrb[0].mxu0 %v1156
        %v1158 = vpop.f32.mrb[0].mxu0
        %v1159 = vadd.f32 %v1085, %v1158
        %v1160 = vpop.f32.mrb[0].mxu0
        %1161 = vdwg.mxu0
        %1162 = vmatprep.subr.mxu0 0.0
        %v1163 = vand.u32 %v783, 4294901760
        %1164 = vmatpush1.msra.mxu0 %v1163
        %1165 = vmatprep.subr.mxu0 0.0
        %1166 = vmatpush1.msra.mxu0 0.0
        %1167 = vmatprep.subr.mxu0 0.0
        %1168 = vmatpush1.msra.mxu0 0.0
        %1169 = vmatprep.subr.mxu0 0.0
        %1170 = vmatpush1.msra.mxu0 0.0
        %1171 = vmatprep.subr.mxu0 0.0
        %1172 = vmatpush1.msra.mxu0 0.0
        %1173 = vmatprep.subr.mxu0 0.0
        %1174 = vmatpush1.msra.mxu0 0.0
        %1175 = vmatprep.subr.mxu0 0.0
        %1176 = vmatpush1.msra.mxu0 0.0
        %1177 = vmatprep.subr.mxu0 0.0
        %1178 = vmatpush1.msra.mxu0 0.0
        %1179 = vmatprep.subr.mxu0 0.0
        %1180 = vmatpush1.msra.mxu0 0.0
        %1181 = vmatprep.subr.mxu0 0.0
        %1182 = vmatpush1.msra.mxu0 0.0
        %1183 = vmatprep.subr.mxu0 0.0
        %1184 = vmatpush1.msra.mxu0 0.0
        %1185 = vmatprep.subr.mxu0 0.0
        %1186 = vmatpush1.msra.mxu0 0.0
        %1187 = vmatprep.subr.mxu0 0.0
        %1188 = vmatpush1.msra.mxu0 0.0
        %1189 = vmatprep.subr.mxu0 0.0
        %1190 = vmatpush1.msra.mxu0 0.0
        %1191 = vmatprep.subr.mxu0 0.0
        %1192 = vmatpush1.msra.mxu0 0.0
        %1193 = vmatprep.subr.mxu0 0.0
        %1194 = vmatpush1.msra.mxu0 0.0
        %1195 = vmatprep.subr.mxu0 0.0
        %1196 = vmatpush1.msra.mxu0 0.0
        %1197 = vmatprep.subr.mxu0 0.0
        %1198 = vmatpush1.msra.mxu0 0.0
        %1199 = vmatprep.subr.mxu0 0.0
        %1200 = vmatpush1.msra.mxu0 0.0
        %1201 = vmatprep.subr.mxu0 0.0
        %1202 = vmatpush1.msra.mxu0 0.0
        %1203 = vmatprep.subr.mxu0 0.0
        %1204 = vmatpush1.msra.mxu0 0.0
        %1205 = vmatprep.subr.mxu0 0.0
        %1206 = vmatpush1.msra.mxu0 0.0
        %1207 = vmatprep.subr.mxu0 0.0
        %1208 = vmatpush1.msra.mxu0 0.0
        %1209 = vmatprep.subr.mxu0 0.0
        %1210 = vmatpush1.msra.mxu0 0.0
        %1211 = vmatprep.subr.mxu0 0.0
        %1212 = vmatpush1.msra.mxu0 0.0
        %1213 = vmatprep.subr.mxu0 0.0
        %1214 = vmatpush1.msra.mxu0 0.0
        %1215 = vmatprep.subr.mxu0 0.0
        %1216 = vmatpush1.msra.mxu0 0.0
        %1217 = vmatprep.subr.mxu0 0.0
        %1218 = vmatpush1.msra.mxu0 0.0
        %1219 = vmatprep.subr.mxu0 0.0
        %1220 = vmatpush1.msra.mxu0 0.0
        %1221 = vmatprep.subr.mxu0 0.0
        %1222 = vmatpush1.msra.mxu0 0.0
        %1223 = vmatprep.subr.mxu0 0.0
        %1224 = vmatpush1.msra.mxu0 0.0
        %1225 = vmatprep.subr.mxu0 0.0
        %1226 = vmatpush1.msra.mxu0 0.0
        %1227 = vmatprep.mubr.f32.mxu0 0.0
        %v1228 = vand.u32 %v786, 4294901760
        %1229 = vmatmul.mubr.f32.gmra.mrb[0].mxu0 %v1228
        %v1230 = vpop.f32.mrb[0].mxu0
        %v1231 = vadd.f32 %v1159, %v1230
        %v1232 = vpop.f32.mrb[0].mxu0
        %1233 = vdwg.mxu0
        %v1234 = vld [vmem:[#allocation5] sm:$0xff]
        %1236 = vset.pattern.permute.xlu0 0
        %1237 = vperm.xlu0 %1236, %v766
        %v1238 = vpop.permute.xlu0 %1237
        %v1240 = vmul.f32 %v1238, %v1234
        %v1241 = vadd.f32 %v1240, %v1231
        %1242 = vst.msk [vmem:[#allocation5] sm:$0xff] %vm303, %v1241
        %1243 = vst.msk [vmem:[#allocation3] sm:$0xff] %vm780, %v764
        %v1244 = vld [vmem:[#allocation2] sm:$0xff]
        %v1245 = vld [vmem:[%s236] sm:$0xff]
        %1247 = vrot.lane.b32.xlu0 %v1244, 112
        %v1248 = vpop.permute.xlu0 %1247
        %1250 = vrot.lane.b32.xlu0 %v1245, 80
        %v1251 = vpop.permute.xlu0 %1250
        %v1252 = vsel %vm303, %v1248, 0
        %v1254 = vsel %vm303, %v1251, 0
        %1256 = vmatprep.subr.mxu0 0.0
        %v1257 = vand.u32 %v1254, 4294901760
        %1258 = vmatpush1.xpose.msra.mxu0 %v1257
        %1259 = vmatprep.subr.mxu0 0.0
        %1260 = vmatpush1.xpose.msra.mxu0 0.0
        %1261 = vmatprep.subr.mxu0 0.0
        %1262 = vmatpush1.xpose.msra.mxu0 0.0
        %1263 = vmatprep.subr.mxu0 0.0
        %1264 = vmatpush1.xpose.msra.mxu0 0.0
        %1265 = vmatprep.subr.mxu0 0.0
        %1266 = vmatpush1.xpose.msra.mxu0 0.0
        %1267 = vmatprep.subr.mxu0 0.0
        %1268 = vmatpush1.xpose.msra.mxu0 0.0
        %1269 = vmatprep.subr.mxu0 0.0
        %1270 = vmatpush1.xpose.msra.mxu0 0.0
        %1271 = vmatprep.subr.mxu0 0.0
        %1272 = vmatpush1.xpose.msra.mxu0 0.0
        %1273 = vmatprep.subr.mxu0 0.0
        %1274 = vmatpush1.xpose.msra.mxu0 0.0
        %1275 = vmatprep.subr.mxu0 0.0
        %1276 = vmatpush1.xpose.msra.mxu0 0.0
        %1277 = vmatprep.subr.mxu0 0.0
        %1278 = vmatpush1.xpose.msra.mxu0 0.0
        %1279 = vmatprep.subr.mxu0 0.0
        %1280 = vmatpush1.xpose.msra.mxu0 0.0
        %1281 = vmatprep.subr.mxu0 0.0
        %1282 = vmatpush1.xpose.msra.mxu0 0.0
        %1283 = vmatprep.subr.mxu0 0.0
        %1284 = vmatpush1.xpose.msra.mxu0 0.0
        %1285 = vmatprep.subr.mxu0 0.0
        %1286 = vmatpush1.xpose.msra.mxu0 0.0
        %1287 = vmatprep.subr.mxu0 0.0
        %1288 = vmatpush1.xpose.msra.mxu0 0.0
        %1289 = vmatprep.subr.mxu0 0.0
        %1290 = vmatpush1.xpose.msra.mxu0 0.0
        %1291 = vmatprep.subr.mxu0 0.0
        %1292 = vmatpush1.xpose.msra.mxu0 0.0
        %1293 = vmatprep.subr.mxu0 0.0
        %1294 = vmatpush1.xpose.msra.mxu0 0.0
        %1295 = vmatprep.subr.mxu0 0.0
        %1296 = vmatpush1.xpose.msra.mxu0 0.0
        %1297 = vmatprep.subr.mxu0 0.0
        %1298 = vmatpush1.xpose.msra.mxu0 0.0
        %1299 = vmatprep.subr.mxu0 0.0
        %1300 = vmatpush1.xpose.msra.mxu0 0.0
        %1301 = vmatprep.subr.mxu0 0.0
        %1302 = vmatpush1.xpose.msra.mxu0 0.0
        %1303 = vmatprep.subr.mxu0 0.0
        %1304 = vmatpush1.xpose.msra.mxu0 0.0
        %1305 = vmatprep.subr.mxu0 0.0
        %1306 = vmatpush1.xpose.msra.mxu0 0.0
        %1307 = vmatprep.subr.mxu0 0.0
        %1308 = vmatpush1.xpose.msra.mxu0 0.0
        %1309 = vmatprep.subr.mxu0 0.0
        %1310 = vmatpush1.xpose.msra.mxu0 0.0
        %1311 = vmatprep.subr.mxu0 0.0
        %1312 = vmatpush1.xpose.msra.mxu0 0.0
        %1313 = vmatprep.subr.mxu0 0.0
        %1314 = vmatpush1.xpose.msra.mxu0 0.0
        %1315 = vmatprep.subr.mxu0 0.0
        %1316 = vmatpush1.xpose.msra.mxu0 0.0
        %1317 = vmatprep.subr.mxu0 0.0
        %1318 = vmatpush1.xpose.msra.mxu0 0.0
        %1319 = vmatprep.subr.mxu0 0.0
        %1320 = vmatpush1.xpose.msra.mxu0 0.0
        %1321 = vmatprep.mubr.f32.mxu0 0.0
        %v1322 = vand.u32 %v1252, 4294901760
        %v1323 = vsub.f32 %v1252, %v1322
        %v1324 = vand.u32 %v1323, 4294901760
        %v1325 = vsub.f32 %v1323, %v1324
        %v1326 = vand.u32 %v1325, 4294901760
        %1327 = vmatmul.mubr.f32.gmra.mrb[0].mxu0 %v1326
        %v1328 = vpop.f32.mrb[0].mxu0
        %v1329 = vadd.f32 0.0, %v1328
        %v1330 = vpop.f32.mrb[0].mxu0
        %1331 = vdwg.mxu0
        %1332 = vmatprep.subr.mxu0 0.0
        %v1333 = vand.u32 %v1254, 4294901760
        %v1334 = vsub.f32 %v1254, %v1333
        %v1335 = vand.u32 %v1334, 4294901760
        %v1336 = vsub.f32 %v1334, %v1335
        %v1337 = vand.u32 %v1336, 4294901760
        %1338 = vmatpush1.xpose.msra.mxu0 %v1337
        %1339 = vmatprep.subr.mxu0 0.0
        %1340 = vmatpush1.xpose.msra.mxu0 0.0
        %1341 = vmatprep.subr.mxu0 0.0
        %1342 = vmatpush1.xpose.msra.mxu0 0.0
        %1343 = vmatprep.subr.mxu0 0.0
        %1344 = vmatpush1.xpose.msra.mxu0 0.0
        %1345 = vmatprep.subr.mxu0 0.0
        %1346 = vmatpush1.xpose.msra.mxu0 0.0
        %1347 = vmatprep.subr.mxu0 0.0
        %1348 = vmatpush1.xpose.msra.mxu0 0.0
        %1349 = vmatprep.subr.mxu0 0.0
        %1350 = vmatpush1.xpose.msra.mxu0 0.0
        %1351 = vmatprep.subr.mxu0 0.0
        %1352 = vmatpush1.xpose.msra.mxu0 0.0
        %1353 = vmatprep.subr.mxu0 0.0
        %1354 = vmatpush1.xpose.msra.mxu0 0.0
        %1355 = vmatprep.subr.mxu0 0.0
        %1356 = vmatpush1.xpose.msra.mxu0 0.0
        %1357 = vmatprep.subr.mxu0 0.0
        %1358 = vmatpush1.xpose.msra.mxu0 0.0
        %1359 = vmatprep.subr.mxu0 0.0
        %1360 = vmatpush1.xpose.msra.mxu0 0.0
        %1361 = vmatprep.subr.mxu0 0.0
        %1362 = vmatpush1.xpose.msra.mxu0 0.0
        %1363 = vmatprep.subr.mxu0 0.0
        %1364 = vmatpush1.xpose.msra.mxu0 0.0
        %1365 = vmatprep.subr.mxu0 0.0
        %1366 = vmatpush1.xpose.msra.mxu0 0.0
        %1367 = vmatprep.subr.mxu0 0.0
        %1368 = vmatpush1.xpose.msra.mxu0 0.0
        %1369 = vmatprep.subr.mxu0 0.0
        %1370 = vmatpush1.xpose.msra.mxu0 0.0
        %1371 = vmatprep.subr.mxu0 0.0
        %1372 = vmatpush1.xpose.msra.mxu0 0.0
        %1373 = vmatprep.subr.mxu0 0.0
        %1374 = vmatpush1.xpose.msra.mxu0 0.0
        %1375 = vmatprep.subr.mxu0 0.0
        %1376 = vmatpush1.xpose.msra.mxu0 0.0
        %1377 = vmatprep.subr.mxu0 0.0
        %1378 = vmatpush1.xpose.msra.mxu0 0.0
        %1379 = vmatprep.subr.mxu0 0.0
        %1380 = vmatpush1.xpose.msra.mxu0 0.0
        %1381 = vmatprep.subr.mxu0 0.0
        %1382 = vmatpush1.xpose.msra.mxu0 0.0
        %1383 = vmatprep.subr.mxu0 0.0
        %1384 = vmatpush1.xpose.msra.mxu0 0.0
        %1385 = vmatprep.subr.mxu0 0.0
        %1386 = vmatpush1.xpose.msra.mxu0 0.0
        %1387 = vmatprep.subr.mxu0 0.0
        %1388 = vmatpush1.xpose.msra.mxu0 0.0
        %1389 = vmatprep.subr.mxu0 0.0
        %1390 = vmatpush1.xpose.msra.mxu0 0.0
        %1391 = vmatprep.subr.mxu0 0.0
        %1392 = vmatpush1.xpose.msra.mxu0 0.0
        %1393 = vmatprep.subr.mxu0 0.0
        %1394 = vmatpush1.xpose.msra.mxu0 0.0
        %1395 = vmatprep.subr.mxu0 0.0
        %1396 = vmatpush1.xpose.msra.mxu0 0.0
        %1397 = vmatprep.subr.mxu0 0.0
        %1398 = vmatpush1.xpose.msra.mxu0 0.0
        %1399 = vmatprep.subr.mxu0 0.0
        %1400 = vmatpush1.xpose.msra.mxu0 0.0
        %1401 = vmatprep.mubr.f32.mxu0 0.0
        %v1402 = vand.u32 %v1252, 4294901760
        %1403 = vmatmul.mubr.f32.gmra.mrb[0].mxu0 %v1402
        %v1404 = vpop.f32.mrb[0].mxu0
        %v1405 = vadd.f32 %v1329, %v1404
        %v1406 = vpop.f32.mrb[0].mxu0
        %1407 = vdwg.mxu0
        %1408 = vmatprep.subr.mxu0 0.0
        %v1409 = vand.u32 %v1254, 4294901760
        %v1410 = vsub.f32 %v1254, %v1409
        %1411 = vmatpush1.xpose.msra.mxu0 %v1410
        %1412 = vmatprep.subr.mxu0 0.0
        %1413 = vmatpush1.xpose.msra.mxu0 0.0
        %1414 = vmatprep.subr.mxu0 0.0
        %1415 = vmatpush1.xpose.msra.mxu0 0.0
        %1416 = vmatprep.subr.mxu0 0.0
        %1417 = vmatpush1.xpose.msra.mxu0 0.0
        %1418 = vmatprep.subr.mxu0 0.0
        %1419 = vmatpush1.xpose.msra.mxu0 0.0
        %1420 = vmatprep.subr.mxu0 0.0
        %1421 = vmatpush1.xpose.msra.mxu0 0.0
        %1422 = vmatprep.subr.mxu0 0.0
        %1423 = vmatpush1.xpose.msra.mxu0 0.0
        %1424 = vmatprep.subr.mxu0 0.0
        %1425 = vmatpush1.xpose.msra.mxu0 0.0
        %1426 = vmatprep.subr.mxu0 0.0
        %1427 = vmatpush1.xpose.msra.mxu0 0.0
        %1428 = vmatprep.subr.mxu0 0.0
        %1429 = vmatpush1.xpose.msra.mxu0 0.0
        %1430 = vmatprep.subr.mxu0 0.0
        %1431 = vmatpush1.xpose.msra.mxu0 0.0
        %1432 = vmatprep.subr.mxu0 0.0
        %1433 = vmatpush1.xpose.msra.mxu0 0.0
        %1434 = vmatprep.subr.mxu0 0.0
        %1435 = vmatpush1.xpose.msra.mxu0 0.0
        %1436 = vmatprep.subr.mxu0 0.0
        %1437 = vmatpush1.xpose.msra.mxu0 0.0
        %1438 = vmatprep.subr.mxu0 0.0
        %1439 = vmatpush1.xpose.msra.mxu0 0.0
        %1440 = vmatprep.subr.mxu0 0.0
        %1441 = vmatpush1.xpose.msra.mxu0 0.0
        %1442 = vmatprep.subr.mxu0 0.0
        %1443 = vmatpush1.xpose.msra.mxu0 0.0
        %1444 = vmatprep.subr.mxu0 0.0
        %1445 = vmatpush1.xpose.msra.mxu0 0.0
        %1446 = vmatprep.subr.mxu0 0.0
        %1447 = vmatpush1.xpose.msra.mxu0 0.0
        %1448 = vmatprep.subr.mxu0 0.0
        %1449 = vmatpush1.xpose.msra.mxu0 0.0
        %1450 = vmatprep.subr.mxu0 0.0
        %1451 = vmatpush1.xpose.msra.mxu0 0.0
        %1452 = vmatprep.subr.mxu0 0.0
        %1453 = vmatpush1.xpose.msra.mxu0 0.0
        %1454 = vmatprep.subr.mxu0 0.0
        %1455 = vmatpush1.xpose.msra.mxu0 0.0
        %1456 = vmatprep.subr.mxu0 0.0
        %1457 = vmatpush1.xpose.msra.mxu0 0.0
        %1458 = vmatprep.subr.mxu0 0.0
        %1459 = vmatpush1.xpose.msra.mxu0 0.0
        %1460 = vmatprep.subr.mxu0 0.0
        %1461 = vmatpush1.xpose.msra.mxu0 0.0
        %1462 = vmatprep.subr.mxu0 0.0
        %1463 = vmatpush1.xpose.msra.mxu0 0.0
        %1464 = vmatprep.subr.mxu0 0.0
        %1465 = vmatpush1.xpose.msra.mxu0 0.0
        %1466 = vmatprep.subr.mxu0 0.0
        %1467 = vmatpush1.xpose.msra.mxu0 0.0
        %1468 = vmatprep.subr.mxu0 0.0
        %1469 = vmatpush1.xpose.msra.mxu0 0.0
        %1470 = vmatprep.subr.mxu0 0.0
        %1471 = vmatpush1.xpose.msra.mxu0 0.0
        %1472 = vmatprep.subr.mxu0 0.0
        %1473 = vmatpush1.xpose.msra.mxu0 0.0
        %1474 = vmatprep.mubr.f32.mxu0 0.0
        %v1475 = vand.u32 %v1252, 4294901760
        %v1476 = vsub.f32 %v1252, %v1475
        %1477 = vmatmul.mubr.f32.gmra.mrb[0].mxu0 %v1476
        %v1478 = vpop.f32.mrb[0].mxu0
        %v1479 = vadd.f32 %v1405, %v1478
        %v1480 = vpop.f32.mrb[0].mxu0
        %1481 = vdwg.mxu0
        %1482 = vmatprep.subr.mxu0 0.0
        %v1483 = vand.u32 %v1254, 4294901760
        %1484 = vmatpush1.xpose.msra.mxu0 %v1483
        %1485 = vmatprep.subr.mxu0 0.0
        %1486 = vmatpush1.xpose.msra.mxu0 0.0
        %1487 = vmatprep.subr.mxu0 0.0
        %1488 = vmatpush1.xpose.msra.mxu0 0.0
        %1489 = vmatprep.subr.mxu0 0.0
        %1490 = vmatpush1.xpose.msra.mxu0 0.0
        %1491 = vmatprep.subr.mxu0 0.0
        %1492 = vmatpush1.xpose.msra.mxu0 0.0
        %1493 = vmatprep.subr.mxu0 0.0
        %1494 = vmatpush1.xpose.msra.mxu0 0.0
        %1495 = vmatprep.subr.mxu0 0.0
        %1496 = vmatpush1.xpose.msra.mxu0 0.0
        %1497 = vmatprep.subr.mxu0 0.0
        %1498 = vmatpush1.xpose.msra.mxu0 0.0
        %1499 = vmatprep.subr.mxu0 0.0
        %1500 = vmatpush1.xpose.msra.mxu0 0.0
        %1501 = vmatprep.subr.mxu0 0.0
        %1502 = vmatpush1.xpose.msra.mxu0 0.0
        %1503 = vmatprep.subr.mxu0 0.0
        %1504 = vmatpush1.xpose.msra.mxu0 0.0
        %1505 = vmatprep.subr.mxu0 0.0
        %1506 = vmatpush1.xpose.msra.mxu0 0.0
        %1507 = vmatprep.subr.mxu0 0.0
        %1508 = vmatpush1.xpose.msra.mxu0 0.0
        %1509 = vmatprep.subr.mxu0 0.0
        %1510 = vmatpush1.xpose.msra.mxu0 0.0
        %1511 = vmatprep.subr.mxu0 0.0
        %1512 = vmatpush1.xpose.msra.mxu0 0.0
        %1513 = vmatprep.subr.mxu0 0.0
        %1514 = vmatpush1.xpose.msra.mxu0 0.0
        %1515 = vmatprep.subr.mxu0 0.0
        %1516 = vmatpush1.xpose.msra.mxu0 0.0
        %1517 = vmatprep.subr.mxu0 0.0
        %1518 = vmatpush1.xpose.msra.mxu0 0.0
        %1519 = vmatprep.subr.mxu0 0.0
        %1520 = vmatpush1.xpose.msra.mxu0 0.0
        %1521 = vmatprep.subr.mxu0 0.0
        %1522 = vmatpush1.xpose.msra.mxu0 0.0
        %1523 = vmatprep.subr.mxu0 0.0
        %1524 = vmatpush1.xpose.msra.mxu0 0.0
        %1525 = vmatprep.subr.mxu0 0.0
        %1526 = vmatpush1.xpose.msra.mxu0 0.0
        %1527 = vmatprep.subr.mxu0 0.0
        %1528 = vmatpush1.xpose.msra.mxu0 0.0
        %1529 = vmatprep.subr.mxu0 0.0
        %1530 = vmatpush1.xpose.msra.mxu0 0.0
        %1531 = vmatprep.subr.mxu0 0.0
        %1532 = vmatpush1.xpose.msra.mxu0 0.0
        %1533 = vmatprep.subr.mxu0 0.0
        %1534 = vmatpush1.xpose.msra.mxu0 0.0
        %1535 = vmatprep.subr.mxu0 0.0
        %1536 = vmatpush1.xpose.msra.mxu0 0.0
        %1537 = vmatprep.subr.mxu0 0.0
        %1538 = vmatpush1.xpose.msra.mxu0 0.0
        %1539 = vmatprep.subr.mxu0 0.0
        %1540 = vmatpush1.xpose.msra.mxu0 0.0
        %1541 = vmatprep.subr.mxu0 0.0
        %1542 = vmatpush1.xpose.msra.mxu0 0.0
        %1543 = vmatprep.subr.mxu0 0.0
        %1544 = vmatpush1.xpose.msra.mxu0 0.0
        %1545 = vmatprep.subr.mxu0 0.0
        %1546 = vmatpush1.xpose.msra.mxu0 0.0
        %1547 = vmatprep.mubr.f32.mxu0 0.0
        %v1548 = vand.u32 %v1252, 4294901760
        %v1549 = vsub.f32 %v1252, %v1548
        %v1550 = vand.u32 %v1549, 4294901760
        %1551 = vmatmul.mubr.f32.gmra.mrb[0].mxu0 %v1550
        %v1552 = vpop.f32.mrb[0].mxu0
        %v1553 = vadd.f32 %v1479, %v1552
        %v1554 = vpop.f32.mrb[0].mxu0
        %1555 = vdwg.mxu0
        %1556 = vmatprep.subr.mxu0 0.0
        %v1557 = vand.u32 %v1254, 4294901760
        %v1558 = vsub.f32 %v1254, %v1557
        %v1559 = vand.u32 %v1558, 4294901760
        %1560 = vmatpush1.xpose.msra.mxu0 %v1559
        %1561 = vmatprep.subr.mxu0 0.0
        %1562 = vmatpush1.xpose.msra.mxu0 0.0
        %1563 = vmatprep.subr.mxu0 0.0
        %1564 = vmatpush1.xpose.msra.mxu0 0.0
        %1565 = vmatprep.subr.mxu0 0.0
        %1566 = vmatpush1.xpose.msra.mxu0 0.0
        %1567 = vmatprep.subr.mxu0 0.0
        %1568 = vmatpush1.xpose.msra.mxu0 0.0
        %1569 = vmatprep.subr.mxu0 0.0
        %1570 = vmatpush1.xpose.msra.mxu0 0.0
        %1571 = vmatprep.subr.mxu0 0.0
        %1572 = vmatpush1.xpose.msra.mxu0 0.0
        %1573 = vmatprep.subr.mxu0 0.0
        %1574 = vmatpush1.xpose.msra.mxu0 0.0
        %1575 = vmatprep.subr.mxu0 0.0
        %1576 = vmatpush1.xpose.msra.mxu0 0.0
        %1577 = vmatprep.subr.mxu0 0.0
        %1578 = vmatpush1.xpose.msra.mxu0 0.0
        %1579 = vmatprep.subr.mxu0 0.0
        %1580 = vmatpush1.xpose.msra.mxu0 0.0
        %1581 = vmatprep.subr.mxu0 0.0
        %1582 = vmatpush1.xpose.msra.mxu0 0.0
        %1583 = vmatprep.subr.mxu0 0.0
        %1584 = vmatpush1.xpose.msra.mxu0 0.0
        %1585 = vmatprep.subr.mxu0 0.0
        %1586 = vmatpush1.xpose.msra.mxu0 0.0
        %1587 = vmatprep.subr.mxu0 0.0
        %1588 = vmatpush1.xpose.msra.mxu0 0.0
        %1589 = vmatprep.subr.mxu0 0.0
        %1590 = vmatpush1.xpose.msra.mxu0 0.0
        %1591 = vmatprep.subr.mxu0 0.0
        %1592 = vmatpush1.xpose.msra.mxu0 0.0
        %1593 = vmatprep.subr.mxu0 0.0
        %1594 = vmatpush1.xpose.msra.mxu0 0.0
        %1595 = vmatprep.subr.mxu0 0.0
        %1596 = vmatpush1.xpose.msra.mxu0 0.0
        %1597 = vmatprep.subr.mxu0 0.0
        %1598 = vmatpush1.xpose.msra.mxu0 0.0
        %1599 = vmatprep.subr.mxu0 0.0
        %1600 = vmatpush1.xpose.msra.mxu0 0.0
        %1601 = vmatprep.subr.mxu0 0.0
        %1602 = vmatpush1.xpose.msra.mxu0 0.0
        %1603 = vmatprep.subr.mxu0 0.0
        %1604 = vmatpush1.xpose.msra.mxu0 0.0
        %1605 = vmatprep.subr.mxu0 0.0
        %1606 = vmatpush1.xpose.msra.mxu0 0.0
        %1607 = vmatprep.subr.mxu0 0.0
        %1608 = vmatpush1.xpose.msra.mxu0 0.0
        %1609 = vmatprep.subr.mxu0 0.0
        %1610 = vmatpush1.xpose.msra.mxu0 0.0
        %1611 = vmatprep.subr.mxu0 0.0
        %1612 = vmatpush1.xpose.msra.mxu0 0.0
        %1613 = vmatprep.subr.mxu0 0.0
        %1614 = vmatpush1.xpose.msra.mxu0 0.0
        %1615 = vmatprep.subr.mxu0 0.0
        %1616 = vmatpush1.xpose.msra.mxu0 0.0
        %1617 = vmatprep.subr.mxu0 0.0
        %1618 = vmatpush1.xpose.msra.mxu0 0.0
        %1619 = vmatprep.subr.mxu0 0.0
        %1620 = vmatpush1.xpose.msra.mxu0 0.0
        %1621 = vmatprep.subr.mxu0 0.0
        %1622 = vmatpush1.xpose.msra.mxu0 0.0
        %1623 = vmatprep.mubr.f32.mxu0 0.0
        %v1624 = vand.u32 %v1252, 4294901760
        %1625 = vmatmul.mubr.f32.gmra.mrb[0].mxu0 %v1624
        %v1626 = vpop.f32.mrb[0].mxu0
        %v1627 = vadd.f32 %v1553, %v1626
        %v1628 = vpop.f32.mrb[0].mxu0
        %1629 = vdwg.mxu0
        %1630 = vmatprep.subr.mxu0 0.0
        %v1631 = vand.u32 %v1254, 4294901760
        %1632 = vmatpush1.xpose.msra.mxu0 %v1631
        %1633 = vmatprep.subr.mxu0 0.0
        %1634 = vmatpush1.xpose.msra.mxu0 0.0
        %1635 = vmatprep.subr.mxu0 0.0
        %1636 = vmatpush1.xpose.msra.mxu0 0.0
        %1637 = vmatprep.subr.mxu0 0.0
        %1638 = vmatpush1.xpose.msra.mxu0 0.0
        %1639 = vmatprep.subr.mxu0 0.0
        %1640 = vmatpush1.xpose.msra.mxu0 0.0
        %1641 = vmatprep.subr.mxu0 0.0
        %1642 = vmatpush1.xpose.msra.mxu0 0.0
        %1643 = vmatprep.subr.mxu0 0.0
        %1644 = vmatpush1.xpose.msra.mxu0 0.0
        %1645 = vmatprep.subr.mxu0 0.0
        %1646 = vmatpush1.xpose.msra.mxu0 0.0
        %1647 = vmatprep.subr.mxu0 0.0
        %1648 = vmatpush1.xpose.msra.mxu0 0.0
        %1649 = vmatprep.subr.mxu0 0.0
        %1650 = vmatpush1.xpose.msra.mxu0 0.0
        %1651 = vmatprep.subr.mxu0 0.0
        %1652 = vmatpush1.xpose.msra.mxu0 0.0
        %1653 = vmatprep.subr.mxu0 0.0
        %1654 = vmatpush1.xpose.msra.mxu0 0.0
        %1655 = vmatprep.subr.mxu0 0.0
        %1656 = vmatpush1.xpose.msra.mxu0 0.0
        %1657 = vmatprep.subr.mxu0 0.0
        %1658 = vmatpush1.xpose.msra.mxu0 0.0
        %1659 = vmatprep.subr.mxu0 0.0
        %1660 = vmatpush1.xpose.msra.mxu0 0.0
        %1661 = vmatprep.subr.mxu0 0.0
        %1662 = vmatpush1.xpose.msra.mxu0 0.0
        %1663 = vmatprep.subr.mxu0 0.0
        %1664 = vmatpush1.xpose.msra.mxu0 0.0
        %1665 = vmatprep.subr.mxu0 0.0
        %1666 = vmatpush1.xpose.msra.mxu0 0.0
        %1667 = vmatprep.subr.mxu0 0.0
        %1668 = vmatpush1.xpose.msra.mxu0 0.0
        %1669 = vmatprep.subr.mxu0 0.0
        %1670 = vmatpush1.xpose.msra.mxu0 0.0
        %1671 = vmatprep.subr.mxu0 0.0
        %1672 = vmatpush1.xpose.msra.mxu0 0.0
        %1673 = vmatprep.subr.mxu0 0.0
        %1674 = vmatpush1.xpose.msra.mxu0 0.0
        %1675 = vmatprep.subr.mxu0 0.0
        %1676 = vmatpush1.xpose.msra.mxu0 0.0
        %1677 = vmatprep.subr.mxu0 0.0
        %1678 = vmatpush1.xpose.msra.mxu0 0.0
        %1679 = vmatprep.subr.mxu0 0.0
        %1680 = vmatpush1.xpose.msra.mxu0 0.0
        %1681 = vmatprep.subr.mxu0 0.0
        %1682 = vmatpush1.xpose.msra.mxu0 0.0
        %1683 = vmatprep.subr.mxu0 0.0
        %1684 = vmatpush1.xpose.msra.mxu0 0.0
        %1685 = vmatprep.subr.mxu0 0.0
        %1686 = vmatpush1.xpose.msra.mxu0 0.0
        %1687 = vmatprep.subr.mxu0 0.0
        %1688 = vmatpush1.xpose.msra.mxu0 0.0
        %1689 = vmatprep.subr.mxu0 0.0
        %1690 = vmatpush1.xpose.msra.mxu0 0.0
        %1691 = vmatprep.subr.mxu0 0.0
        %1692 = vmatpush1.xpose.msra.mxu0 0.0
        %1693 = vmatprep.subr.mxu0 0.0
        %1694 = vmatpush1.xpose.msra.mxu0 0.0
        %1695 = vmatprep.mubr.f32.mxu0 0.0
        %v1696 = vand.u32 %v1252, 4294901760
        %1697 = vmatmul.mubr.f32.gmra.mrb[0].mxu0 %v1696
        %v1698 = vpop.f32.mrb[0].mxu0
        %v1699 = vadd.f32 %v1627, %v1698
        %v1700 = vpop.f32.mrb[0].mxu0
        %1701 = vdwg.mxu0
        %v1702 = vsel %vm757, %v1699, -1e+30
        %s1703 = scalar_lea.vmem [#allocation3], 8
        %v1704 = vld [vmem:[%s1703] sm:$0xff]
        %v1705 = vsel %vm760, %v1702, -inf
        %1706 = vmax.xlane.f32.xlu0 %v1705
        %v1707 = vpop.xlane.xlu0 %1706
        %v1708 = vmax.f32 %v1704, %v1707
        %v1709 = vsub.f32 %v1704, %v1708
        %v1710 = vpow.pop %v1709
        %1712 = vset.pattern.permute.xlu0 0
        %1713 = vperm.xlu0 %1712, %v1708
        %v1714 = vpop.permute.xlu0 %1713
        %v1716 = vsub.f32 %v1702, %v1714
        %v1717 = vpow.pop %v1716
        %s1718 = scalar_lea.vmem [#allocation4], 8
        %v1719 = vld [vmem:[%s1718] sm:$0xff]
        %v1720 = vmul.f32 %v1710, %v1719
        %v1721 = vsel %vm760, %v1717, 0.0
        %1722 = vadd.xlane.f32.xlu0 %v1721
        %v1723 = vpop.xlane.xlu0 %1722
        %v1724 = vadd.f32 %v1720, %v1723
        %1725 = vst.msk [vmem:[%s1718] sm:$0xff] %vm780, %v1724
        %1726 = vrot.lane.b32.xlu0 %v1245, 48
        %v1727 = vpop.permute.xlu0 %1726
        %v1730 = vsel %vm760, %v1717, 0
        %1732 = vmatprep.subr.mxu0 0.0
        %v1733 = vand.u32 %v1727, 4294901760
        %1734 = vmatpush1.msra.mxu0 %v1733
        %1735 = vmatprep.subr.mxu0 0.0
        %1736 = vmatpush1.msra.mxu0 0.0
        %1737 = vmatprep.subr.mxu0 0.0
        %1738 = vmatpush1.msra.mxu0 0.0
        %1739 = vmatprep.subr.mxu0 0.0
        %1740 = vmatpush1.msra.mxu0 0.0
        %1741 = vmatprep.subr.mxu0 0.0
        %1742 = vmatpush1.msra.mxu0 0.0
        %1743 = vmatprep.subr.mxu0 0.0
        %1744 = vmatpush1.msra.mxu0 0.0
        %1745 = vmatprep.subr.mxu0 0.0
        %1746 = vmatpush1.msra.mxu0 0.0
        %1747 = vmatprep.subr.mxu0 0.0
        %1748 = vmatpush1.msra.mxu0 0.0
        %1749 = vmatprep.subr.mxu0 0.0
        %1750 = vmatpush1.msra.mxu0 0.0
        %1751 = vmatprep.subr.mxu0 0.0
        %1752 = vmatpush1.msra.mxu0 0.0
        %1753 = vmatprep.subr.mxu0 0.0
        %1754 = vmatpush1.msra.mxu0 0.0
        %1755 = vmatprep.subr.mxu0 0.0
        %1756 = vmatpush1.msra.mxu0 0.0
        %1757 = vmatprep.subr.mxu0 0.0
        %1758 = vmatpush1.msra.mxu0 0.0
        %1759 = vmatprep.subr.mxu0 0.0
        %1760 = vmatpush1.msra.mxu0 0.0
        %1761 = vmatprep.subr.mxu0 0.0
        %1762 = vmatpush1.msra.mxu0 0.0
        %1763 = vmatprep.subr.mxu0 0.0
        %1764 = vmatpush1.msra.mxu0 0.0
        %1765 = vmatprep.subr.mxu0 0.0
        %1766 = vmatpush1.msra.mxu0 0.0
        %1767 = vmatprep.subr.mxu0 0.0
        %1768 = vmatpush1.msra.mxu0 0.0
        %1769 = vmatprep.subr.mxu0 0.0
        %1770 = vmatpush1.msra.mxu0 0.0
        %1771 = vmatprep.subr.mxu0 0.0
        %1772 = vmatpush1.msra.mxu0 0.0
        %1773 = vmatprep.subr.mxu0 0.0
        %1774 = vmatpush1.msra.mxu0 0.0
        %1775 = vmatprep.subr.mxu0 0.0
        %1776 = vmatpush1.msra.mxu0 0.0
        %1777 = vmatprep.subr.mxu0 0.0
        %1778 = vmatpush1.msra.mxu0 0.0
        %1779 = vmatprep.subr.mxu0 0.0
        %1780 = vmatpush1.msra.mxu0 0.0
        %1781 = vmatprep.subr.mxu0 0.0
        %1782 = vmatpush1.msra.mxu0 0.0
        %1783 = vmatprep.subr.mxu0 0.0
        %1784 = vmatpush1.msra.mxu0 0.0
        %1785 = vmatprep.subr.mxu0 0.0
        %1786 = vmatpush1.msra.mxu0 0.0
        %1787 = vmatprep.subr.mxu0 0.0
        %1788 = vmatpush1.msra.mxu0 0.0
        %1789 = vmatprep.subr.mxu0 0.0
        %1790 = vmatpush1.msra.mxu0 0.0
        %1791 = vmatprep.subr.mxu0 0.0
        %1792 = vmatpush1.msra.mxu0 0.0
        %1793 = vmatprep.subr.mxu0 0.0
        %1794 = vmatpush1.msra.mxu0 0.0
        %1795 = vmatprep.subr.mxu0 0.0
        %1796 = vmatpush1.msra.mxu0 0.0
        %1797 = vmatprep.mubr.f32.mxu0 0.0
        %v1798 = vand.u32 %v1730, 4294901760
        %v1799 = vsub.f32 %v1730, %v1798
        %v1800 = vand.u32 %v1799, 4294901760
        %v1801 = vsub.f32 %v1799, %v1800
        %v1802 = vand.u32 %v1801, 4294901760
        %1803 = vmatmul.mubr.f32.gmra.mrb[0].mxu0 %v1802
        %v1804 = vpop.f32.mrb[0].mxu0
        %v1805 = vadd.f32 0.0, %v1804
        %v1806 = vpop.f32.mrb[0].mxu0
        %1807 = vdwg.mxu0
        %1808 = vmatprep.subr.mxu0 0.0
        %v1809 = vand.u32 %v1727, 4294901760
        %v1810 = vsub.f32 %v1727, %v1809
        %v1811 = vand.u32 %v1810, 4294901760
        %v1812 = vsub.f32 %v1810, %v1811
        %v1813 = vand.u32 %v1812, 4294901760
        %1814 = vmatpush1.msra.mxu0 %v1813
        %1815 = vmatprep.subr.mxu0 0.0
        %1816 = vmatpush1.msra.mxu0 0.0
        %1817 = vmatprep.subr.mxu0 0.0
        %1818 = vmatpush1.msra.mxu0 0.0
        %1819 = vmatprep.subr.mxu0 0.0
        %1820 = vmatpush1.msra.mxu0 0.0
        %1821 = vmatprep.subr.mxu0 0.0
        %1822 = vmatpush1.msra.mxu0 0.0
        %1823 = vmatprep.subr.mxu0 0.0
        %1824 = vmatpush1.msra.mxu0 0.0
        %1825 = vmatprep.subr.mxu0 0.0
        %1826 = vmatpush1.msra.mxu0 0.0
        %1827 = vmatprep.subr.mxu0 0.0
        %1828 = vmatpush1.msra.mxu0 0.0
        %1829 = vmatprep.subr.mxu0 0.0
        %1830 = vmatpush1.msra.mxu0 0.0
        %1831 = vmatprep.subr.mxu0 0.0
        %1832 = vmatpush1.msra.mxu0 0.0
        %1833 = vmatprep.subr.mxu0 0.0
        %1834 = vmatpush1.msra.mxu0 0.0
        %1835 = vmatprep.subr.mxu0 0.0
        %1836 = vmatpush1.msra.mxu0 0.0
        %1837 = vmatprep.subr.mxu0 0.0
        %1838 = vmatpush1.msra.mxu0 0.0
        %1839 = vmatprep.subr.mxu0 0.0
        %1840 = vmatpush1.msra.mxu0 0.0
        %1841 = vmatprep.subr.mxu0 0.0
        %1842 = vmatpush1.msra.mxu0 0.0
        %1843 = vmatprep.subr.mxu0 0.0
        %1844 = vmatpush1.msra.mxu0 0.0
        %1845 = vmatprep.subr.mxu0 0.0
        %1846 = vmatpush1.msra.mxu0 0.0
        %1847 = vmatprep.subr.mxu0 0.0
        %1848 = vmatpush1.msra.mxu0 0.0
        %1849 = vmatprep.subr.mxu0 0.0
        %1850 = vmatpush1.msra.mxu0 0.0
        %1851 = vmatprep.subr.mxu0 0.0
        %1852 = vmatpush1.msra.mxu0 0.0
        %1853 = vmatprep.subr.mxu0 0.0
        %1854 = vmatpush1.msra.mxu0 0.0
        %1855 = vmatprep.subr.mxu0 0.0
        %1856 = vmatpush1.msra.mxu0 0.0
        %1857 = vmatprep.subr.mxu0 0.0
        %1858 = vmatpush1.msra.mxu0 0.0
        %1859 = vmatprep.subr.mxu0 0.0
        %1860 = vmatpush1.msra.mxu0 0.0
        %1861 = vmatprep.subr.mxu0 0.0
        %1862 = vmatpush1.msra.mxu0 0.0
        %1863 = vmatprep.subr.mxu0 0.0
        %1864 = vmatpush1.msra.mxu0 0.0
        %1865 = vmatprep.subr.mxu0 0.0
        %1866 = vmatpush1.msra.mxu0 0.0
        %1867 = vmatprep.subr.mxu0 0.0
        %1868 = vmatpush1.msra.mxu0 0.0
        %1869 = vmatprep.subr.mxu0 0.0
        %1870 = vmatpush1.msra.mxu0 0.0
        %1871 = vmatprep.subr.mxu0 0.0
        %1872 = vmatpush1.msra.mxu0 0.0
        %1873 = vmatprep.subr.mxu0 0.0
        %1874 = vmatpush1.msra.mxu0 0.0
        %1875 = vmatprep.subr.mxu0 0.0
        %1876 = vmatpush1.msra.mxu0 0.0
        %1877 = vmatprep.mubr.f32.mxu0 0.0
        %v1878 = vand.u32 %v1730, 4294901760
        %1879 = vmatmul.mubr.f32.gmra.mrb[0].mxu0 %v1878
        %v1880 = vpop.f32.mrb[0].mxu0
        %v1881 = vadd.f32 %v1805, %v1880
        %v1882 = vpop.f32.mrb[0].mxu0
        %1883 = vdwg.mxu0
        %1884 = vmatprep.subr.mxu0 0.0
        %v1885 = vand.u32 %v1727, 4294901760
        %v1886 = vsub.f32 %v1727, %v1885
        %1887 = vmatpush1.msra.mxu0 %v1886
        %1888 = vmatprep.subr.mxu0 0.0
        %1889 = vmatpush1.msra.mxu0 0.0
        %1890 = vmatprep.subr.mxu0 0.0
        %1891 = vmatpush1.msra.mxu0 0.0
        %1892 = vmatprep.subr.mxu0 0.0
        %1893 = vmatpush1.msra.mxu0 0.0
        %1894 = vmatprep.subr.mxu0 0.0
        %1895 = vmatpush1.msra.mxu0 0.0
        %1896 = vmatprep.subr.mxu0 0.0
        %1897 = vmatpush1.msra.mxu0 0.0
        %1898 = vmatprep.subr.mxu0 0.0
        %1899 = vmatpush1.msra.mxu0 0.0
        %1900 = vmatprep.subr.mxu0 0.0
        %1901 = vmatpush1.msra.mxu0 0.0
        %1902 = vmatprep.subr.mxu0 0.0
        %1903 = vmatpush1.msra.mxu0 0.0
        %1904 = vmatprep.subr.mxu0 0.0
        %1905 = vmatpush1.msra.mxu0 0.0
        %1906 = vmatprep.subr.mxu0 0.0
        %1907 = vmatpush1.msra.mxu0 0.0
        %1908 = vmatprep.subr.mxu0 0.0
        %1909 = vmatpush1.msra.mxu0 0.0
        %1910 = vmatprep.subr.mxu0 0.0
        %1911 = vmatpush1.msra.mxu0 0.0
        %1912 = vmatprep.subr.mxu0 0.0
        %1913 = vmatpush1.msra.mxu0 0.0
        %1914 = vmatprep.subr.mxu0 0.0
        %1915 = vmatpush1.msra.mxu0 0.0
        %1916 = vmatprep.subr.mxu0 0.0
        %1917 = vmatpush1.msra.mxu0 0.0
        %1918 = vmatprep.subr.mxu0 0.0
        %1919 = vmatpush1.msra.mxu0 0.0
        %1920 = vmatprep.subr.mxu0 0.0
        %1921 = vmatpush1.msra.mxu0 0.0
        %1922 = vmatprep.subr.mxu0 0.0
        %1923 = vmatpush1.msra.mxu0 0.0
        %1924 = vmatprep.subr.mxu0 0.0
        %1925 = vmatpush1.msra.mxu0 0.0
        %1926 = vmatprep.subr.mxu0 0.0
        %1927 = vmatpush1.msra.mxu0 0.0
        %1928 = vmatprep.subr.mxu0 0.0
        %1929 = vmatpush1.msra.mxu0 0.0
        %1930 = vmatprep.subr.mxu0 0.0
        %1931 = vmatpush1.msra.mxu0 0.0
        %1932 = vmatprep.subr.mxu0 0.0
        %1933 = vmatpush1.msra.mxu0 0.0
        %1934 = vmatprep.subr.mxu0 0.0
        %1935 = vmatpush1.msra.mxu0 0.0
        %1936 = vmatprep.subr.mxu0 0.0
        %1937 = vmatpush1.msra.mxu0 0.0
        %1938 = vmatprep.subr.mxu0 0.0
        %1939 = vmatpush1.msra.mxu0 0.0
        %1940 = vmatprep.subr.mxu0 0.0
        %1941 = vmatpush1.msra.mxu0 0.0
        %1942 = vmatprep.subr.mxu0 0.0
        %1943 = vmatpush1.msra.mxu0 0.0
        %1944 = vmatprep.subr.mxu0 0.0
        %1945 = vmatpush1.msra.mxu0 0.0
        %1946 = vmatprep.subr.mxu0 0.0
        %1947 = vmatpush1.msra.mxu0 0.0
        %1948 = vmatprep.subr.mxu0 0.0
        %1949 = vmatpush1.msra.mxu0 0.0
        %1950 = vmatprep.mubr.f32.mxu0 0.0
        %v1951 = vand.u32 %v1730, 4294901760
        %v1952 = vsub.f32 %v1730, %v1951
        %1953 = vmatmul.mubr.f32.gmra.mrb[0].mxu0 %v1952
        %v1954 = vpop.f32.mrb[0].mxu0
        %v1955 = vadd.f32 %v1881, %v1954
        %v1956 = vpop.f32.mrb[0].mxu0
        %1957 = vdwg.mxu0
        %1958 = vmatprep.subr.mxu0 0.0
        %v1959 = vand.u32 %v1727, 4294901760
        %1960 = vmatpush1.msra.mxu0 %v1959
        %1961 = vmatprep.subr.mxu0 0.0
        %1962 = vmatpush1.msra.mxu0 0.0
        %1963 = vmatprep.subr.mxu0 0.0
        %1964 = vmatpush1.msra.mxu0 0.0
        %1965 = vmatprep.subr.mxu0 0.0
        %1966 = vmatpush1.msra.mxu0 0.0
        %1967 = vmatprep.subr.mxu0 0.0
        %1968 = vmatpush1.msra.mxu0 0.0
        %1969 = vmatprep.subr.mxu0 0.0
        %1970 = vmatpush1.msra.mxu0 0.0
        %1971 = vmatprep.subr.mxu0 0.0
        %1972 = vmatpush1.msra.mxu0 0.0
        %1973 = vmatprep.subr.mxu0 0.0
        %1974 = vmatpush1.msra.mxu0 0.0
        %1975 = vmatprep.subr.mxu0 0.0
        %1976 = vmatpush1.msra.mxu0 0.0
        %1977 = vmatprep.subr.mxu0 0.0
        %1978 = vmatpush1.msra.mxu0 0.0
        %1979 = vmatprep.subr.mxu0 0.0
        %1980 = vmatpush1.msra.mxu0 0.0
        %1981 = vmatprep.subr.mxu0 0.0
        %1982 = vmatpush1.msra.mxu0 0.0
        %1983 = vmatprep.subr.mxu0 0.0
        %1984 = vmatpush1.msra.mxu0 0.0
        %1985 = vmatprep.subr.mxu0 0.0
        %1986 = vmatpush1.msra.mxu0 0.0
        %1987 = vmatprep.subr.mxu0 0.0
        %1988 = vmatpush1.msra.mxu0 0.0
        %1989 = vmatprep.subr.mxu0 0.0
        %1990 = vmatpush1.msra.mxu0 0.0
        %1991 = vmatprep.subr.mxu0 0.0
        %1992 = vmatpush1.msra.mxu0 0.0
        %1993 = vmatprep.subr.mxu0 0.0
        %1994 = vmatpush1.msra.mxu0 0.0
        %1995 = vmatprep.subr.mxu0 0.0
        %1996 = vmatpush1.msra.mxu0 0.0
        %1997 = vmatprep.subr.mxu0 0.0
        %1998 = vmatpush1.msra.mxu0 0.0
        %1999 = vmatprep.subr.mxu0 0.0
        %2000 = vmatpush1.msra.mxu0 0.0
        %2001 = vmatprep.subr.mxu0 0.0
        %2002 = vmatpush1.msra.mxu0 0.0
        %2003 = vmatprep.subr.mxu0 0.0
        %2004 = vmatpush1.msra.mxu0 0.0
        %2005 = vmatprep.subr.mxu0 0.0
        %2006 = vmatpush1.msra.mxu0 0.0
        %2007 = vmatprep.subr.mxu0 0.0
        %2008 = vmatpush1.msra.mxu0 0.0
        %2009 = vmatprep.subr.mxu0 0.0
        %2010 = vmatpush1.msra.mxu0 0.0
        %2011 = vmatprep.subr.mxu0 0.0
        %2012 = vmatpush1.msra.mxu0 0.0
        %2013 = vmatprep.subr.mxu0 0.0
        %2014 = vmatpush1.msra.mxu0 0.0
        %2015 = vmatprep.subr.mxu0 0.0
        %2016 = vmatpush1.msra.mxu0 0.0
        %2017 = vmatprep.subr.mxu0 0.0
        %2018 = vmatpush1.msra.mxu0 0.0
        %2019 = vmatprep.subr.mxu0 0.0
        %2020 = vmatpush1.msra.mxu0 0.0
        %2021 = vmatprep.subr.mxu0 0.0
        %2022 = vmatpush1.msra.mxu0 0.0
        %2023 = vmatprep.mubr.f32.mxu0 0.0
        %v2024 = vand.u32 %v1730, 4294901760
        %v2025 = vsub.f32 %v1730, %v2024
        %v2026 = vand.u32 %v2025, 4294901760
        %2027 = vmatmul.mubr.f32.gmra.mrb[0].mxu0 %v2026
        %v2028 = vpop.f32.mrb[0].mxu0
        %v2029 = vadd.f32 %v1955, %v2028
        %v2030 = vpop.f32.mrb[0].mxu0
        %2031 = vdwg.mxu0
        %2032 = vmatprep.subr.mxu0 0.0
        %v2033 = vand.u32 %v1727, 4294901760
        %v2034 = vsub.f32 %v1727, %v2033
        %v2035 = vand.u32 %v2034, 4294901760
        %2036 = vmatpush1.msra.mxu0 %v2035
        %2037 = vmatprep.subr.mxu0 0.0
        %2038 = vmatpush1.msra.mxu0 0.0
        %2039 = vmatprep.subr.mxu0 0.0
        %2040 = vmatpush1.msra.mxu0 0.0
        %2041 = vmatprep.subr.mxu0 0.0
        %2042 = vmatpush1.msra.mxu0 0.0
        %2043 = vmatprep.subr.mxu0 0.0
        %2044 = vmatpush1.msra.mxu0 0.0
        %2045 = vmatprep.subr.mxu0 0.0
        %2046 = vmatpush1.msra.mxu0 0.0
        %2047 = vmatprep.subr.mxu0 0.0
        %2048 = vmatpush1.msra.mxu0 0.0
        %2049 = vmatprep.subr.mxu0 0.0
        %2050 = vmatpush1.msra.mxu0 0.0
        %2051 = vmatprep.subr.mxu0 0.0
        %2052 = vmatpush1.msra.mxu0 0.0
        %2053 = vmatprep.subr.mxu0 0.0
        %2054 = vmatpush1.msra.mxu0 0.0
        %2055 = vmatprep.subr.mxu0 0.0
        %2056 = vmatpush1.msra.mxu0 0.0
        %2057 = vmatprep.subr.mxu0 0.0
        %2058 = vmatpush1.msra.mxu0 0.0
        %2059 = vmatprep.subr.mxu0 0.0
        %2060 = vmatpush1.msra.mxu0 0.0
        %2061 = vmatprep.subr.mxu0 0.0
        %2062 = vmatpush1.msra.mxu0 0.0
        %2063 = vmatprep.subr.mxu0 0.0
        %2064 = vmatpush1.msra.mxu0 0.0
        %2065 = vmatprep.subr.mxu0 0.0
        %2066 = vmatpush1.msra.mxu0 0.0
        %2067 = vmatprep.subr.mxu0 0.0
        %2068 = vmatpush1.msra.mxu0 0.0
        %2069 = vmatprep.subr.mxu0 0.0
        %2070 = vmatpush1.msra.mxu0 0.0
        %2071 = vmatprep.subr.mxu0 0.0
        %2072 = vmatpush1.msra.mxu0 0.0
        %2073 = vmatprep.subr.mxu0 0.0
        %2074 = vmatpush1.msra.mxu0 0.0
        %2075 = vmatprep.subr.mxu0 0.0
        %2076 = vmatpush1.msra.mxu0 0.0
        %2077 = vmatprep.subr.mxu0 0.0
        %2078 = vmatpush1.msra.mxu0 0.0
        %2079 = vmatprep.subr.mxu0 0.0
        %2080 = vmatpush1.msra.mxu0 0.0
        %2081 = vmatprep.subr.mxu0 0.0
        %2082 = vmatpush1.msra.mxu0 0.0
        %2083 = vmatprep.subr.mxu0 0.0
        %2084 = vmatpush1.msra.mxu0 0.0
        %2085 = vmatprep.subr.mxu0 0.0
        %2086 = vmatpush1.msra.mxu0 0.0
        %2087 = vmatprep.subr.mxu0 0.0
        %2088 = vmatpush1.msra.mxu0 0.0
        %2089 = vmatprep.subr.mxu0 0.0
        %2090 = vmatpush1.msra.mxu0 0.0
        %2091 = vmatprep.subr.mxu0 0.0
        %2092 = vmatpush1.msra.mxu0 0.0
        %2093 = vmatprep.subr.mxu0 0.0
        %2094 = vmatpush1.msra.mxu0 0.0
        %2095 = vmatprep.subr.mxu0 0.0
        %2096 = vmatpush1.msra.mxu0 0.0
        %2097 = vmatprep.subr.mxu0 0.0
        %2098 = vmatpush1.msra.mxu0 0.0
        %2099 = vmatprep.mubr.f32.mxu0 0.0
        %v2100 = vand.u32 %v1730, 4294901760
        %2101 = vmatmul.mubr.f32.gmra.mrb[0].mxu0 %v2100
        %v2102 = vpop.f32.mrb[0].mxu0
        %v2103 = vadd.f32 %v2029, %v2102
        %v2104 = vpop.f32.mrb[0].mxu0
        %2105 = vdwg.mxu0
        %2106 = vmatprep.subr.mxu0 0.0
        %v2107 = vand.u32 %v1727, 4294901760
        %2108 = vmatpush1.msra.mxu0 %v2107
        %2109 = vmatprep.subr.mxu0 0.0
        %2110 = vmatpush1.msra.mxu0 0.0
        %2111 = vmatprep.subr.mxu0 0.0
        %2112 = vmatpush1.msra.mxu0 0.0
        %2113 = vmatprep.subr.mxu0 0.0
        %2114 = vmatpush1.msra.mxu0 0.0
        %2115 = vmatprep.subr.mxu0 0.0
        %2116 = vmatpush1.msra.mxu0 0.0
        %2117 = vmatprep.subr.mxu0 0.0
        %2118 = vmatpush1.msra.mxu0 0.0
        %2119 = vmatprep.subr.mxu0 0.0
        %2120 = vmatpush1.msra.mxu0 0.0
        %2121 = vmatprep.subr.mxu0 0.0
        %2122 = vmatpush1.msra.mxu0 0.0
        %2123 = vmatprep.subr.mxu0 0.0
        %2124 = vmatpush1.msra.mxu0 0.0
        %2125 = vmatprep.subr.mxu0 0.0
        %2126 = vmatpush1.msra.mxu0 0.0
        %2127 = vmatprep.subr.mxu0 0.0
        %2128 = vmatpush1.msra.mxu0 0.0
        %2129 = vmatprep.subr.mxu0 0.0
        %2130 = vmatpush1.msra.mxu0 0.0
        %2131 = vmatprep.subr.mxu0 0.0
        %2132 = vmatpush1.msra.mxu0 0.0
        %2133 = vmatprep.subr.mxu0 0.0
        %2134 = vmatpush1.msra.mxu0 0.0
        %2135 = vmatprep.subr.mxu0 0.0
        %2136 = vmatpush1.msra.mxu0 0.0
        %2137 = vmatprep.subr.mxu0 0.0
        %2138 = vmatpush1.msra.mxu0 0.0
        %2139 = vmatprep.subr.mxu0 0.0
        %2140 = vmatpush1.msra.mxu0 0.0
        %2141 = vmatprep.subr.mxu0 0.0
        %2142 = vmatpush1.msra.mxu0 0.0
        %2143 = vmatprep.subr.mxu0 0.0
        %2144 = vmatpush1.msra.mxu0 0.0
        %2145 = vmatprep.subr.mxu0 0.0
        %2146 = vmatpush1.msra.mxu0 0.0
        %2147 = vmatprep.subr.mxu0 0.0
        %2148 = vmatpush1.msra.mxu0 0.0
        %2149 = vmatprep.subr.mxu0 0.0
        %2150 = vmatpush1.msra.mxu0 0.0
        %2151 = vmatprep.subr.mxu0 0.0
        %2152 = vmatpush1.msra.mxu0 0.0
        %2153 = vmatprep.subr.mxu0 0.0
        %2154 = vmatpush1.msra.mxu0 0.0
        %2155 = vmatprep.subr.mxu0 0.0
        %2156 = vmatpush1.msra.mxu0 0.0
        %2157 = vmatprep.subr.mxu0 0.0
        %2158 = vmatpush1.msra.mxu0 0.0
        %2159 = vmatprep.subr.mxu0 0.0
        %2160 = vmatpush1.msra.mxu0 0.0
        %2161 = vmatprep.subr.mxu0 0.0
        %2162 = vmatpush1.msra.mxu0 0.0
        %2163 = vmatprep.subr.mxu0 0.0
        %2164 = vmatpush1.msra.mxu0 0.0
        %2165 = vmatprep.subr.mxu0 0.0
        %2166 = vmatpush1.msra.mxu0 0.0
        %2167 = vmatprep.subr.mxu0 0.0
        %2168 = vmatpush1.msra.mxu0 0.0
        %2169 = vmatprep.subr.mxu0 0.0
        %2170 = vmatpush1.msra.mxu0 0.0
        %2171 = vmatprep.mubr.f32.mxu0 0.0
        %v2172 = vand.u32 %v1730, 4294901760
        %2173 = vmatmul.mubr.f32.gmra.mrb[0].mxu0 %v2172
        %v2174 = vpop.f32.mrb[0].mxu0
        %v2175 = vadd.f32 %v2103, %v2174
        %v2176 = vpop.f32.mrb[0].mxu0
        %2177 = vdwg.mxu0
        %s2178 = scalar_lea.vmem [#allocation5], 8
        %v2179 = vld [vmem:[%s2178] sm:$0xff]
        %2181 = vset.pattern.permute.xlu0 0
        %2182 = vperm.xlu0 %2181, %v1710
        %v2183 = vpop.permute.xlu0 %2182
        %v2185 = vmul.f32 %v2183, %v2179
        %v2186 = vadd.f32 %v2185, %v2175
        %2187 = vst.msk [vmem:[%s2178] sm:$0xff] %vm303, %v2186
        %2188 = vst.msk [vmem:[%s1703] sm:$0xff] %vm780, %v1708
        // Predicated region
        $region45: #{tpu_custom_call.1} parent=31 // pred_check
          %p2189 = pneg %p280
        $region46: #{tpu_custom_call.1} parent=31 // pred_check_branch
          %2191 = sbr.rel (%p2189) target = $region48
        $region47: #{tpu_custom_call.1} parent=31 // pred_region
          %v2192 = vld [vmem:[#allocation5] sm:$0xff]
          %v2193 = vld [vmem:[#allocation4] sm:$0xff]
          %2195 = vset.pattern.permute.xlu0 0
          %2196 = vperm.xlu0 %2195, %v2193
          %v2197 = vpop.permute.xlu0 %2196
          %v2199 = vrcp.pop %v2197
          %v2200 = vmul.f32 %v2192, %v2199
          %v2201 = vld [vmem:[%s2178] sm:$0xff]
          %v2202 = vld [vmem:[%s1718] sm:$0xff]
          %2204 = vset.pattern.permute.xlu0 0
          %2205 = vperm.xlu0 %2204, %v2202
          %v2206 = vpop.permute.xlu0 %2205
          %v2208 = vrcp.pop %v2206
          %v2209 = vmul.f32 %v2201, %v2208
          %2211 = vrot.lane.b32.xlu0 %v2209, 16
          %v2212 = vpop.permute.xlu0 %2211
          %v2214 = vsel %vm303, %v2200, %v2212
          %vm2215 = vcmask 261120
          %2216 = vst.msk [vmem:[%s270] sm:$0xff] %vm2215, %v2214
        $region48: #{tpu_custom_call.1} parent=31 // pred_fallthru
          _
        %s2217 = sand.u32 %s136, 1
        %s2218 = scalar_lea.sflag [#allocation8], %s2217
        %s2219 = sand.u32 %s136, 1
        %s2220 = smul.addr %s2219, 8
        %s2221 = scalar_lea.vmem [#allocation11], %s2220
        // Predicated region
        $region49: #{tpu_custom_call.1} parent=31 // pred_check
          %p2222 = pneg %p146
        $region50: #{tpu_custom_call.1} parent=31 // pred_check_branch
          %2224 = sbr.rel (%p2222) target = $region52
        $region51: #{tpu_custom_call.1} parent=31 // pred_region
          %s2226 = ssub.s32 128, 128
          %2227 = vsyncadd %s2218, %s2226
          %s2228 = sadd.s32 %s29, %s28
          %s2229 = smul.addr %s2228, 128
          %s2230 = scalar_lea.hbm %s3, %s2229
          %s2232 = sshll.u32 %s2221, 4
          %s2233 = int_to_ptr.vmem [resolvable:$true] %s2232
          %2235 = dma.vmem_to_hbm [thread:$0]  %s2233, 128, %s2230, %s2218
        $region52: #{tpu_custom_call.1} parent=31 // pred_fallthru
          _
      $region32: #{tpu_custom_call.1} parent=5 // pred_fallthru
        _
      %p2236 = scmp.le.s32.totalorder 2, %s18
      // Predicated region
      $region53: #{tpu_custom_call.1} parent=5 // pred_check
        %p2237 = pneg %p2236
      $region54: #{tpu_custom_call.1} parent=5 // pred_check_branch
        %2239 = sbr.rel (%p2237) target = $region56
      $region55: #{tpu_custom_call.1} parent=5 // pred_region
        %s2240 = ssub.s32 %s18, 2
        // Predicated region
        $region57: #{tpu_custom_call.1} parent=55 // pred_check
          %p2241 = pneg %p152
        $region58: #{tpu_custom_call.1} parent=55 // pred_check_branch
          %2243 = sbr.rel (%p2241) target = $region60
        $region59: #{tpu_custom_call.1} parent=55 // pred_region
          %s2244 = sand.u32 %s137, 1
          %s2245 = scalar_lea.sflag [#allocation8], %s2244
          %s2246 = sand.u32 %s137, 1
          %s2247 = smul.addr %s2246, 8
          %s2248 = scalar_lea.vmem [#allocation11], %s2247
          %2249 = dma.done %s2245, 128
        $region60: #{tpu_custom_call.1} parent=55 // pred_fallthru
          _
      $region56: #{tpu_custom_call.1} parent=5 // pred_fallthru
        _
    $region6: #{tpu_custom_call.1} parent=1 // loop_footer
      %s22 = sadd.s32 1, %s18
    $region7: #{tpu_custom_call.1} parent=1 // loop_footer_branch
      %17 = sbr.rel target = $region3
    $region8: #{tpu_custom_call.1} parent=1 // loop_exit
      _
    %2250 = vsyncpa [#allocation7], 1
    %s2251 = scalar_lea.sflag [#allocation7], 1
    %2252 = vsyncpa %s2251, 1
    %2253 = vsyncpa [#allocation10], 1
    %s2254 = scalar_lea.sflag [#allocation10], 1
    %2255 = vsyncpa %s2254, 1
    %2256 = vsyncpa [#allocation8], 1
    %s2257 = scalar_lea.sflag [#allocation8], 1
    %2258 = vsyncpa %s2257, 1

</llo_original>
